<compile_context>
chip_gen: v6e
topology: v6e:2x2x1
jax: 0.10.0
libtpu: 0.0.40
codegen_flags: <defaults>
</compile_context>

<pallas_src>
import jax
import jax.numpy as jnp
from jax.experimental import pallas as pl
from jax.experimental.pallas import tpu as pltpu

EPS = 1e-5


def _round_up(x, m):
    return (x + m - 1) // m * m


def _padded_bytes(shape2d, itemsize):
    """VMEM bytes for a 2-D tile after sublane/lane padding."""
    r, c = shape2d
    sub = 8 * (4 // itemsize)          # f32 -> 8, bf16 -> 16, int8 -> 32
    return _round_up(r, sub) * _round_up(c, 128) * itemsize


def _vmem_limit_bytes():
    """~100 MiB on 128 MiB parts (v5e/v6e), ~48 MiB on 64 MiB parts (v7x)."""
    cap = 128 * 1024 * 1024
    try:
        cap = int(getattr(pltpu.get_tpu_info(), "vmem_capacity_bytes", cap))
    except Exception:
        pass
    return max(32 * 1024 * 1024, min(int(cap * 0.78), cap - 16 * 1024 * 1024))


def classifier_h2_kernel(x_ref, w1a_ref, w1b_ref, b1_ref, w3_ref, b3_ref, out_ref):
    """One batch tile of the fused head.

    x_ref   : (TN, C, HW)  native-layout activation tile (no transpose in HBM)
    w1a/w1b : (C, H1)      BN0-folded fc1 weight, split into avg / max halves
    b1      : (1, H1)      BN0-folded fc1 bias (f32)
    w3      : (H1, OUT_P)  BN1-folded fc3 weight, lane-padded to a multiple of 128
    b3      : (1, OUT_P)   BN1-folded fc3 bias (f32)
    out     : (TN, OUT_P)  lane-dense logits (f32)
    """
    x = x_ref[...]                                        # (TN, C, HW), no f32 copy
    inv_hw = 1.0 / x.shape[-1]
    # AdaptiveAvgPool2d / AdaptiveMaxPool2d((1,1)): lane-axis reductions (XLU).
    avg = jnp.sum(x, axis=-1, dtype=jnp.float32) * inv_hw  # (TN, C), f32 accumulation
    mx = jnp.max(x, axis=-1).astype(jnp.float32)           # (TN, C), exact in bf16

    # cat([avg, mx], 1) @ W1 == avg @ W1[:C] + mx @ W1[C:]   (no concat materialized)
    h = jnp.dot(avg.astype(w1a_ref.dtype), w1a_ref[...],
                preferred_element_type=jnp.float32)
    h = h + jnp.dot(mx.astype(w1b_ref.dtype), w1b_ref[...],
                    preferred_element_type=jnp.float32)
    h = jnp.maximum(h + b1_ref[...], 0.0)                  # folded-BN0 bias + ReLU
    # Dropout0 / Dropout1: identity in eval mode.

    out_ref[...] = (
        jnp.dot(h.astype(w3_ref.dtype), w3_ref[...],
                preferred_element_type=jnp.float32) + b3_ref[...]
    ).astype(out_ref.dtype)


def prepare_params(params, c, compute_dtype=jnp.float32):
    """Fold eval-mode BN0/BN1 into fc1/fc3, split for concat elimination, lane-pad fc3.

    Call ONCE per model (hoisted out of the per-forward path)."""
    s0 = params["bn0_gamma"] * jax.lax.rsqrt(params["bn0_var"] + EPS)        # (1, 2C)
    w1f = params["w1"] * s0.reshape(-1, 1)                                    # (2C, H1)
    b1f = (params["bn0_beta"] - params["bn0_mean"] * s0) @ params["w1"] + params["b1"]
    s1 = params["bn1_gamma"] * jax.lax.rsqrt(params["bn1_var"] + EPS)         # (1, H1)
    w3f = params["w3"] * s1.reshape(-1, 1)                                    # (H1, OUT)
    b3f = (params["bn1_beta"] - params["bn1_mean"] * s1) @ params["w3"] + params["b3"]

    h1 = w1f.shape[1]
    out_dim = w3f.shape[1]
    out_pad = _round_up(out_dim, 128)   # lane-dense output: pad cols, slice after
    w3p = jnp.zeros((h1, out_pad), w3f.dtype).at[:, :out_dim].set(w3f)
    b3p = jnp.zeros((1, out_pad), b3f.dtype).at[:, :out_dim].set(b3f)

    return {
        "w1a": w1f[:c].astype(compute_dtype),
        "w1b": w1f[c:].astype(compute_dtype),
        "b1": b1f.astype(jnp.float32),          # biases stay f32 (f32 accumulator)
        "w3": w3p.astype(compute_dtype),
        "b3": b3p.astype(jnp.float32),
        "out_dim": out_dim,
    }


def classifier_h2_forward(x, prepared, *, block_n=256, x_dtype=None):
    """x: (N, C, H, W).  Returns logits (N, OUT) float32."""
    n, c, h, w = x.shape
    hw = h * w

    w1a, w1b, b1 = prepared["w1a"], prepared["w1b"], prepared["b1"]
    w3p, b3p = prepared["w3"], prepared["b3"]
    out_dim = prepared["out_dim"]
    h1 = w1a.shape[1]
    out_pad = w3p.shape[1]

    if x_dtype is not None and x_dtype != x.dtype:
        x = x.astype(x_dtype)                    # optional bf16 DMA path
    x_itemsize = x.dtype.itemsize
    w_itemsize = w1a.dtype.itemsize

    # No NCHW->NHWC transpose: keep the native (N, C, H*W) layout (free reshape);
    # pooling reduces the lane (HW) axis in-kernel, so the only HBM pass over x
    # is the pipeline's own DMA.
    x3 = x.reshape(n, c, hw)

    # --- VMEM-driven tile derivation -------------------------------------------
    vmem_limit = _vmem_limit_bytes()
    w_bytes = (2 * _padded_bytes((c, h1), w_itemsize)
               + _padded_bytes((h1, out_pad), w_itemsize)
               + _padded_bytes((1, h1), 4) + _padded_bytes((1, out_pad), 4))
    per_row_x = _padded_bytes((c, hw), x_itemsize)     # one batch row of the x tile
    per_row_out = out_pad * 4
    budget = int(vmem_limit * 0.85) - w_bytes
    tn_max = max(8, budget // (2 * per_row_x + 2 * per_row_out))  # double-buffered
    n8 = _round_up(n, 8)
    tn = max(8, min(block_n, n8, (tn_max // 8) * 8))
    if n8 >= 16:                                   # keep >=2 grid steps when possible
        tn = min(tn, max(8, (n8 // 2) // 8 * 8))
    # TODO(synk): for very large C, verify the (TN, C) f32 pool accumulators do not
    # spill (bundle vld/vst slot_util) and lower TN further if they do.

    n_pad = _round_up(n, tn)
    if n_pad != n:
        x3 = jnp.pad(x3, ((0, n_pad - n), (0, 0), (0, 0)))

    # Advisory roofline info for XLA's scheduler: this call is HBM-bound on x.
    flops = 2 * n_pad * c * hw + 2 * n_pad * (2 * c * h1 + h1 * out_pad)
    bytes_accessed = (n_pad * c * hw * x_itemsize
                      + (2 * c * h1 + h1 * out_pad) * w_itemsize
                      + (h1 + out_pad) * 4
                      + n_pad * out_pad * 4)
    cost = pl.CostEstimate(flops=int(flops), transcendentals=0,
                           bytes_accessed=int(bytes_accessed))

    def _run(single_buffer_weights):
        if single_buffer_weights:
            # Resident (constant index_map) operands: single buffer, no duplication.
            def const_spec(shape):
                return pl.BlockSpec(shape, lambda i: (0, 0),
                                    pipeline_mode=pl.Buffered(1))
        else:
            def const_spec(shape):
                return pl.BlockSpec(shape, lambda i: (0, 0))

        grid_spec = pltpu.PrefetchScalarGridSpec(
            num_scalar_prefetch=0,
            grid=(n_pad // tn,),
            in_specs=[
                pl.BlockSpec((tn, c, hw), lambda i: (i, 0, 0)),  # x tile (pipelined)
                const_spec((c, h1)),        # w1a (avg half of folded fc1)
                const_spec((c, h1)),        # w1b (max half of folded fc1)
                const_spec((1, h1)),        # folded fc1 bias
                const_spec((h1, out_pad)),  # folded fc3 weight (lane-padded)
                const_spec((1, out_pad)),   # folded fc3 bias
            ],
            out_specs=pl.BlockSpec((tn, out_pad), lambda i: (i, 0)),
        )
        return pl.pallas_call(
            classifier_h2_kernel,
            out_shape=jax.ShapeDtypeStruct((n_pad, out_pad), jnp.float32),
            grid_spec=grid_spec,
            compiler_params=pltpu.CompilerParams(
                dimension_semantics=("parallel",),     # megacore sharding on v7x
                vmem_limit_bytes=int(vmem_limit),
            ),
            cost_estimate=cost,
        )(x3, w1a, w1b, b1, w3p, b3p)

    try:
        out = _run(True)
    except Exception:
        # pl.Buffered(1) single-buffering not supported on this build; weights are
        # then default double-buffered (still correct, slightly more VMEM).
        out = _run(False)

    return out[:n, :out_dim]


def init_params(key, inp, h1, output):
    """Deterministic synthetic parameters matching ClassifierH2(inp, h1, output)."""
    ks = jax.random.split(key, 10)
    f0 = 2 * inp  # BatchNorm1d(inp*2) / fc1 in-features
    p = {
        "bn0_gamma": jax.random.uniform(ks[0], (1, f0), jnp.float32, 0.5, 1.5),
        "bn0_beta":  jax.random.normal(ks[1], (1, f0), jnp.float32) * 0.1,
        "bn0_mean":  jax.random.normal(ks[2], (1, f0), jnp.float32) * 0.1,
        "bn0_var":   jax.random.uniform(ks[3], (1, f0), jnp.float32, 0.5, 1.5),
        # fc1: Linear(inp*2, h1) stored pre-transposed (in, out)
        "w1": jax.random.normal(ks[4], (f0, h1), jnp.float32) * (1.0 / jnp.sqrt(f0)),
        "b1": jax.random.normal(ks[5], (1, h1), jnp.float32) * 0.05,
        "bn1_gamma": jax.random.uniform(ks[6], (1, h1), jnp.float32, 0.5, 1.5),
        "bn1_beta":  jax.random.normal(ks[7], (1, h1), jnp.float32) * 0.1,
        "bn1_mean":  jax.random.normal(ks[8], (1, h1), jnp.float32) * 0.1,
        "bn1_var":   jax.random.uniform(ks[9], (1, h1), jnp.float32, 0.5, 1.5),
        # fc3: Linear(h1, output) pre-transposed
        "w3": jax.random.normal(jax.random.fold_in(key, 100), (h1, output),
                                jnp.float32) * (1.0 / jnp.sqrt(h1)),
        "b3": jax.random.normal(jax.random.fold_in(key, 101), (1, output),
                                jnp.float32) * 0.05,
    }
    return p


def reference_forward(x, params):
    """Pure-JAX reference (eval-mode PyTorch semantics), no BN folding."""
    n, c, h, w = x.shape
    avg = jnp.mean(x.reshape(n, c, -1), axis=-1)
    mx = jnp.max(x.reshape(n, c, -1), axis=-1)
    feat = jnp.concatenate([avg, mx], axis=1)
    s0 = params["bn0_gamma"] / jnp.sqrt(params["bn0_var"] + EPS)
    y = (feat - params["bn0_mean"]) * s0 + params["bn0_beta"]
    y = jnp.maximum(y @ params["w1"] + params["b1"], 0.0)
    s1 = params["bn1_gamma"] / jnp.sqrt(params["bn1_var"] + EPS)
    y = (y - params["bn1_mean"]) * s1 + params["bn1_beta"]
    return y @ params["w3"] + params["b3"]


if __name__ == "__main__":
    # Small shapes consistent with the module: inp=channels, h1 hidden, output classes.
    N, INP, H, W = 4, 32, 8, 8
    H1, OUT = 64, 16

    key = jax.random.PRNGKey(0)
    kx, kp = jax.random.split(key)
    x = jax.random.normal(kx, (N, INP, H, W), jnp.float32)
    params = init_params(kp, INP, H1, OUT)

    ref = reference_forward(x, params)

    # f32 path (default) — strict check.
    prep_f32 = prepare_params(params, INP, compute_dtype=jnp.float32)
    out = jax.block_until_ready(classifier_h2_forward(x, prep_f32))
    assert out.shape == (N, OUT)
    assert jnp.allclose(out, ref, rtol=2e-4, atol=2e-4), "f32 mismatch vs reference"

    # bf16 DMA/MXU path (f32 pooling + accumulation) — looser tolerance since x
    # itself is quantized to bf16 before pooling.
    prep_bf16 = prepare_params(params, INP, compute_dtype=jnp.bfloat16)
    out_bf16 = jax.block_until_ready(
        classifier_h2_forward(x, prep_bf16, x_dtype=jnp.bfloat16))
    assert out_bf16.shape == (N, OUT)
    assert jnp.allclose(out_bf16, ref, rtol=1e-1, atol=1e-1), "bf16 mismatch vs reference"

    print("KERNEL_OK")
</pallas_src>

<mosaic_0001>
module attributes {stable_mosaic.version = 11 : i64} {
  func.func @classifier_h2_kernel(%arg0: i32, %arg1: memref<8x32x64xf32, #tpu.memory_space<vmem>>, %arg2: memref<32x64xf32, #tpu.memory_space<vmem>>, %arg3: memref<32x64xf32, #tpu.memory_space<vmem>>, %arg4: memref<1x64xf32, #tpu.memory_space<vmem>>, %arg5: memref<64x128xf32, #tpu.memory_space<vmem>>, %arg6: memref<1x128xf32, #tpu.memory_space<vmem>>, %arg7: memref<8x128xf32, #tpu.memory_space<vmem>>) attributes {dimension_semantics = [#tpu.dimension_semantics<parallel>], iteration_bounds = array<i64: 1>, scalar_prefetch = 0 : i64, scratch_operands = 0 : i64, tpu.core_type = #tpu.core_type<tc>, window_params = [{transform_indices = @transform_0, window_bounds = array<i64: 8, 32, 64>}, {pipeline_mode = #tpu.pipeline_mode<synchronous>, transform_indices = @transform_1, window_bounds = array<i64: 32, 64>}, {pipeline_mode = #tpu.pipeline_mode<synchronous>, transform_indices = @transform_2, window_bounds = array<i64: 32, 64>}, {pipeline_mode = #tpu.pipeline_mode<synchronous>, transform_indices = @transform_3, window_bounds = array<i64: 1, 64>}, {pipeline_mode = #tpu.pipeline_mode<synchronous>, transform_indices = @transform_4, window_bounds = array<i64: 64, 128>}, {pipeline_mode = #tpu.pipeline_mode<synchronous>, transform_indices = @transform_5, window_bounds = array<i64: 1, 128>}, {transform_indices = @transform_6, window_bounds = array<i64: 8, 128>}]} {
    %c0 = arith.constant 0 : index
    %c0_0 = arith.constant 0 : index
    %c0_1 = arith.constant 0 : index
    %0 = vector.load %arg1[%c0, %c0_0, %c0_1] : memref<8x32x64xf32, #tpu.memory_space<vmem>>, vector<8x32x64xf32>
    %cst = arith.constant dense<0.000000e+00> : vector<8x32xf32>
    %1 = vector.multi_reduction <add>, %0, %cst [2] : vector<8x32x64xf32> to vector<8x32xf32>
    %cst_2 = arith.constant 1.562500e-02 : f32
    %2 = vector.broadcast %cst_2 : f32 to vector<8x32xf32>
    %3 = arith.mulf %1, %2 : vector<8x32xf32>
    %cst_3 = arith.constant dense<0xFF800000> : vector<8x32xf32>
    %4 = vector.multi_reduction <maximumf>, %0, %cst_3 [2] : vector<8x32x64xf32> to vector<8x32xf32>
    %c0_4 = arith.constant 0 : index
    %c0_5 = arith.constant 0 : index
    %5 = vector.load %arg2[%c0_4, %c0_5] : memref<32x64xf32, #tpu.memory_space<vmem>>, vector<32x64xf32>
    %cst_6 = arith.constant dense<0.000000e+00> : vector<8x64xf32>
    %6 = tpu.matmul %3, %5, %cst_6 {dimension_numbers = #tpu.dot_dimension_numbers<[1], [0], [0], [1], [0, 0, 1, 1], [], []>} : vector<8x32xf32>, vector<32x64xf32>, vector<8x64xf32> -> vector<8x64xf32>
    %c0_7 = arith.constant 0 : index
    %c0_8 = arith.constant 0 : index
    %7 = vector.load %arg3[%c0_7, %c0_8] : memref<32x64xf32, #tpu.memory_space<vmem>>, vector<32x64xf32>
    %cst_9 = arith.constant dense<0.000000e+00> : vector<8x64xf32>
    %8 = tpu.matmul %4, %7, %cst_9 {dimension_numbers = #tpu.dot_dimension_numbers<[1], [0], [0], [1], [0, 0, 1, 1], [], []>} : vector<8x32xf32>, vector<32x64xf32>, vector<8x64xf32> -> vector<8x64xf32>
    %9 = arith.addf %6, %8 : vector<8x64xf32>
    %c0_10 = arith.constant 0 : index
    %c0_11 = arith.constant 0 : index
    %10 = vector.load %arg4[%c0_10, %c0_11] : memref<1x64xf32, #tpu.memory_space<vmem>>, vector<1x64xf32>
    %11 = vector.broadcast %10 : vector<1x64xf32> to vector<8x64xf32>
    %12 = arith.addf %9, %11 : vector<8x64xf32>
    %cst_12 = arith.constant 0.000000e+00 : f32
    %13 = vector.broadcast %cst_12 : f32 to vector<8x64xf32>
    %14 = arith.maximumf %12, %13 : vector<8x64xf32>
    %c0_13 = arith.constant 0 : index
    %c0_14 = arith.constant 0 : index
    %15 = vector.load %arg5[%c0_13, %c0_14] : memref<64x128xf32, #tpu.memory_space<vmem>>, vector<64x128xf32>
    %cst_15 = arith.constant dense<0.000000e+00> : vector<8x128xf32>
    %16 = tpu.matmul %14, %15, %cst_15 {dimension_numbers = #tpu.dot_dimension_numbers<[1], [0], [0], [1], [0, 0, 1, 1], [], []>} : vector<8x64xf32>, vector<64x128xf32>, vector<8x128xf32> -> vector<8x128xf32>
    %c0_16 = arith.constant 0 : index
    %c0_17 = arith.constant 0 : index
    %17 = vector.load %arg6[%c0_16, %c0_17] : memref<1x128xf32, #tpu.memory_space<vmem>>, vector<1x128xf32>
    %18 = vector.broadcast %17 : vector<1x128xf32> to vector<8x128xf32>
    %19 = arith.addf %16, %18 : vector<8x128xf32>
    %c0_18 = arith.constant 0 : index
    %c0_19 = arith.constant 0 : index
    %20 = vector.load %arg7[%c0_18, %c0_19] : memref<8x128xf32, #tpu.memory_space<vmem>>, vector<8x128xf32>
    tpu.vector_store %arg7[%c0_18, %c0_19], %19 {strides = array<i32>} : memref<8x128xf32, #tpu.memory_space<vmem>>, vector<8x128xf32>,
    return
  }
  func.func @transform_0(%arg0: i32) -> (i32, i32, i32) {
    %c0_i32 = arith.constant 0 : i32
    %c0_i32_0 = arith.constant 0 : i32
    %c0_i32_1 = arith.constant 0 : i32
    return %arg0, %c0_i32, %c0_i32_0 : i32, i32, i32
  }
  func.func @transform_1(%arg0: i32) -> (i32, i32) {
    %c0_i32 = arith.constant 0 : i32
    %c0_i32_0 = arith.constant 0 : i32
    %c0_i32_1 = arith.constant 0 : i32
    return %c0_i32, %c0_i32_0 : i32, i32
  }
  func.func @transform_2(%arg0: i32) -> (i32, i32) {
    %c0_i32 = arith.constant 0 : i32
    %c0_i32_0 = arith.constant 0 : i32
    %c0_i32_1 = arith.constant 0 : i32
    return %c0_i32, %c0_i32_0 : i32, i32
  }
  func.func @transform_3(%arg0: i32) -> (i32, i32) {
    %c0_i32 = arith.constant 0 : i32
    %c0_i32_0 = arith.constant 0 : i32
    %c0_i32_1 = arith.constant 0 : i32
    return %c0_i32, %c0_i32_0 : i32, i32
  }
  func.func @transform_4(%arg0: i32) -> (i32, i32) {
    %c0_i32 = arith.constant 0 : i32
    %c0_i32_0 = arith.constant 0 : i32
    %c0_i32_1 = arith.constant 0 : i32
    return %c0_i32, %c0_i32_0 : i32, i32
  }
  func.func @transform_5(%arg0: i32) -> (i32, i32) {
    %c0_i32 = arith.constant 0 : i32
    %c0_i32_0 = arith.constant 0 : i32
    %c0_i32_1 = arith.constant 0 : i32
    return %c0_i32, %c0_i32_0 : i32, i32
  }
  func.func @transform_6(%arg0: i32) -> (i32, i32) {
    %c0_i32 = arith.constant 0 : i32
    %c0_i32_0 = arith.constant 0 : i32
    return %arg0, %c0_i32 : i32, i32
  }
}

module attributes {stable_mosaic.version = 11 : i64} {
  func.func @classifier_h2_kernel(%arg0: i32, %arg1: memref<8x32x64xf32, #tpu.memory_space<vmem>>, %arg2: memref<32x64xf32, #tpu.memory_space<vmem>>, %arg3: memref<32x64xf32, #tpu.memory_space<vmem>>, %arg4: memref<1x64xf32, #tpu.memory_space<vmem>>, %arg5: memref<64x128xf32, #tpu.memory_space<vmem>>, %arg6: memref<1x128xf32, #tpu.memory_space<vmem>>, %arg7: memref<8x128xf32, #tpu.memory_space<vmem>>) attributes {dimension_semantics = [#tpu.dimension_semantics<parallel>], iteration_bounds = array<i64: 1>, scalar_prefetch = 0 : i64, scratch_operands = 0 : i64, tpu.core_type = #tpu.core_type<tc>, window_params = [{transform_indices = @transform_0, window_bounds = array<i64: 8, 32, 64>}, {pipeline_mode = #tpu.pipeline_mode<synchronous>, transform_indices = @transform_1, window_bounds = array<i64: 32, 64>}, {pipeline_mode = #tpu.pipeline_mode<synchronous>, transform_indices = @transform_2, window_bounds = array<i64: 32, 64>}, {pipeline_mode = #tpu.pipeline_mode<synchronous>, transform_indices = @transform_3, window_bounds = array<i64: 1, 64>}, {pipeline_mode = #tpu.pipeline_mode<synchronous>, transform_indices = @transform_4, window_bounds = array<i64: 64, 128>}, {pipeline_mode = #tpu.pipeline_mode<synchronous>, transform_indices = @transform_5, window_bounds = array<i64: 1, 128>}, {transform_indices = @transform_6, window_bounds = array<i64: 8, 128>}]} {
    %c0 = arith.constant 0 : index
    %c0_0 = arith.constant 0 : index
    %c0_1 = arith.constant 0 : index
    %0 = vector.load %arg1[%c0, %c0_0, %c0_1] : memref<8x32x64xf32, #tpu.memory_space<vmem>>, vector<8x32x64xf32>
    %cst = arith.constant dense<0.000000e+00> : vector<8x32xf32>
    %1 = vector.multi_reduction <add>, %0, %cst [2] : vector<8x32x64xf32> to vector<8x32xf32>
    %cst_2 = arith.constant 1.562500e-02 : f32
    %2 = vector.broadcast %cst_2 : f32 to vector<8x32xf32>
    %3 = arith.mulf %1, %2 : vector<8x32xf32>
    %cst_3 = arith.constant dense<0xFF800000> : vector<8x32xf32>
    %4 = vector.multi_reduction <maximumf>, %0, %cst_3 [2] : vector<8x32x64xf32> to vector<8x32xf32>
    %c0_4 = arith.constant 0 : index
    %c0_5 = arith.constant 0 : index
    %5 = vector.load %arg2[%c0_4, %c0_5] : memref<32x64xf32, #tpu.memory_space<vmem>>, vector<32x64xf32>
    %cst_6 = arith.constant dense<0.000000e+00> : vector<8x64xf32>
    %6 = tpu.matmul %3, %5, %cst_6 {dimension_numbers = #tpu.dot_dimension_numbers<[1], [0], [0], [1], [0, 0, 1, 1], [], []>} : vector<8x32xf32>, vector<32x64xf32>, vector<8x64xf32> -> vector<8x64xf32>
    %c0_7 = arith.constant 0 : index
    %c0_8 = arith.constant 0 : index
    %7 = vector.load %arg3[%c0_7, %c0_8] : memref<32x64xf32, #tpu.memory_space<vmem>>, vector<32x64xf32>
    %cst_9 = arith.constant dense<0.000000e+00> : vector<8x64xf32>
    %8 = tpu.matmul %4, %7, %cst_9 {dimension_numbers = #tpu.dot_dimension_numbers<[1], [0], [0], [1], [0, 0, 1, 1], [], []>} : vector<8x32xf32>, vector<32x64xf32>, vector<8x64xf32> -> vector<8x64xf32>
    %9 = arith.addf %6, %8 : vector<8x64xf32>
    %c0_10 = arith.constant 0 : index
    %c0_11 = arith.constant 0 : index
    %10 = vector.load %arg4[%c0_10, %c0_11] : memref<1x64xf32, #tpu.memory_space<vmem>>, vector<1x64xf32>
    %11 = vector.broadcast %10 : vector<1x64xf32> to vector<8x64xf32>
    %12 = arith.addf %9, %11 : vector<8x64xf32>
    %cst_12 = arith.constant 0.000000e+00 : f32
    %13 = vector.broadcast %cst_12 : f32 to vector<8x64xf32>
    %14 = arith.maximumf %12, %13 : vector<8x64xf32>
    %c0_13 = arith.constant 0 : index
    %c0_14 = arith.constant 0 : index
    %15 = vector.load %arg5[%c0_13, %c0_14] : memref<64x128xf32, #tpu.memory_space<vmem>>, vector<64x128xf32>
    %cst_15 = arith.constant dense<0.000000e+00> : vector<8x128xf32>
    %16 = tpu.matmul %14, %15, %cst_15 {dimension_numbers = #tpu.dot_dimension_numbers<[1], [0], [0], [1], [0, 0, 1, 1], [], []>} : vector<8x64xf32>, vector<64x128xf32>, vector<8x128xf32> -> vector<8x128xf32>
    %c0_16 = arith.constant 0 : index
    %c0_17 = arith.constant 0 : index
    %17 = vector.load %arg6[%c0_16, %c0_17] : memref<1x128xf32, #tpu.memory_space<vmem>>, vector<1x128xf32>
    %18 = vector.broadcast %17 : vector<1x128xf32> to vector<8x128xf32>
    %19 = arith.addf %16, %18 : vector<8x128xf32>
    %c0_18 = arith.constant 0 : index
    %c0_19 = arith.constant 0 : index
    %20 = vector.load %arg7[%c0_18, %c0_19] : memref<8x128xf32, #tpu.memory_space<vmem>>, vector<8x128xf32>
    tpu.vector_store %arg7[%c0_18, %c0_19], %19 {strides = array<i32>} : memref<8x128xf32, #tpu.memory_space<vmem>>, vector<8x128xf32>,
    return
  }
  func.func @transform_0(%arg0: i32) -> (i32, i32, i32) {
    %c0_i32 = arith.constant 0 : i32
    %c0_i32_0 = arith.constant 0 : i32
    %c0_i32_1 = arith.constant 0 : i32
    return %arg0, %c0_i32, %c0_i32_0 : i32, i32, i32
  }
  func.func @transform_1(%arg0: i32) -> (i32, i32) {
    %c0_i32 = arith.constant 0 : i32
    %c0_i32_0 = arith.constant 0 : i32
    %c0_i32_1 = arith.constant 0 : i32
    return %c0_i32, %c0_i32_0 : i32, i32
  }
  func.func @transform_2(%arg0: i32) -> (i32, i32) {
    %c0_i32 = arith.constant 0 : i32
    %c0_i32_0 = arith.constant 0 : i32
    %c0_i32_1 = arith.constant 0 : i32
    return %c0_i32, %c0_i32_0 : i32, i32
  }
  func.func @transform_3(%arg0: i32) -> (i32, i32) {
    %c0_i32 = arith.constant 0 : i32
    %c0_i32_0 = arith.constant 0 : i32
    %c0_i32_1 = arith.constant 0 : i32
    return %c0_i32, %c0_i32_0 : i32, i32
  }
  func.func @transform_4(%arg0: i32) -> (i32, i32) {
    %c0_i32 = arith.constant 0 : i32
    %c0_i32_0 = arith.constant 0 : i32
    %c0_i32_1 = arith.constant 0 : i32
    return %c0_i32, %c0_i32_0 : i32, i32
  }
  func.func @transform_5(%arg0: i32) -> (i32, i32) {
    %c0_i32 = arith.constant 0 : i32
    %c0_i32_0 = arith.constant 0 : i32
    %c0_i32_1 = arith.constant 0 : i32
    return %c0_i32, %c0_i32_0 : i32, i32
  }
  func.func @transform_6(%arg0: i32) -> (i32, i32) {
    %c0_i32 = arith.constant 0 : i32
    %c0_i32_0 = arith.constant 0 : i32
    return %arg0, %c0_i32 : i32, i32
  }
}

</mosaic_0001>

<llo_original>
// kernel: tpu_custom_call.1
$region0: #{tpu_custom_call.1}
  #allocation0 [shape = 'u32[]', space=smem, size = 0x4, offset = 0x4, fixed_abs, tag = 'smem constant byte address 0x4 - core index']
  #allocation1 [shape = 'u32[144,128]{1,0:T(1,128)}', space=vmem, size = 0x12000, scoped, tag = 'internal scratch']
  %s0 = inlined_call_operand.hbm [shape: f32[8,32,64], index: 0, kind: input, shape index: {}]
  %s1 = inlined_call_operand.hbm [shape: f32[32,64], index: 1, kind: input, shape index: {}]
  %s2 = inlined_call_operand.hbm [shape: f32[32,64], index: 2, kind: input, shape index: {}]
  %s3 = inlined_call_operand.vmem [shape: f32[1,64], index: 3, kind: input, shape index: {}]
  %s4 = inlined_call_operand.hbm [shape: f32[64,128], index: 4, kind: input, shape index: {}]
  %s5 = inlined_call_operand.vmem [shape: f32[1,128], index: 5, kind: input, shape index: {}]
  %s6 = inlined_call_operand.hbm [shape: f32[8,128], index: 6, kind: output, shape index: {}]
  %s7 = sld [smem:[#allocation0]]
  $region50: #{tpu_custom_call.1} parent=0
    _
  %s9 = ssub.s32 1, %s7
  %s10 = scalar_select 0, %s9, %s7
  $region1: #{tpu_custom_call.1} parent=0
    #allocation2 [shape = 'u8[131072]{0}', space=vmem, size = 0x20000, scoped, tag = 'input window, operand 0, single buffered']
    #allocation3 [shape = 's32[1]{0}', space=sflag, size = 0x4, scoped, tag = 'scoped memory for tpu_custom_call.1']
    #allocation4 [shape = 's32[1]{0}', space=sflag, size = 0x4, scoped, tag = 'scoped memory for tpu_custom_call.1']
    #allocation5 [shape = 'u8[16384]{0}', space=vmem, size = 0x4000, scoped, tag = 'input window, operand 1, single buffered']
    #allocation6 [shape = 's32[1]{0}', space=sflag, size = 0x4, scoped, tag = 'scoped memory for tpu_custom_call.1']
    #allocation7 [shape = 'u8[16384]{0}', space=vmem, size = 0x4000, scoped, tag = 'input window, operand 2, single buffered']
    #allocation8 [shape = 'u8[32768]{0}', space=vmem, size = 0x8000, scoped, tag = 'input window, operand 4, single buffered']
    #allocation9 [shape = 's32[1]{0}', space=sflag, size = 0x4, scoped, tag = 'scoped memory for tpu_custom_call.1']
    #allocation10 [shape = 'u8[4096]{0}', space=vmem, size = 0x1000, scoped, tag = 'output window, operand 0, single buffered']
    %11 = vsyncpa [#allocation3], 0
    %12 = vsyncpa [#allocation6], 0
    %13 = vsyncpa [#allocation9], 0
    %14 = vsyncpa [#allocation4], 0
    // Predicated region
    $region2: #{tpu_custom_call.1} parent=1 // pred_check
      _
    $region3: #{tpu_custom_call.1} parent=1 // pred_check_branch
      %16 = sbr.rel (0) target = $region5
    $region4: #{tpu_custom_call.1} parent=1 // pred_region
      %s18 = ssub.s32 4096, 4096
      %19 = vsyncadd [#allocation3], %s18
      %s20 = sshll.u32 [#allocation2], 4
      %s21 = int_to_ptr.vmem [resolvable:$true] %s20
      %26 = dma.hbm_to_vmem [thread:$0]  %s0, 4096, %s21, [#allocation3], 128, 128, 8
    $region5: #{tpu_custom_call.1} parent=1 // pred_fallthru
      _
    // Predicated region
    $region6: #{tpu_custom_call.1} parent=1 // pred_check
      _
    $region7: #{tpu_custom_call.1} parent=1 // pred_check_branch
      %28 = sbr.rel (0) target = $region9
    $region8: #{tpu_custom_call.1} parent=1 // pred_region
      %s30 = ssub.s32 512, 512
      %31 = vsyncadd [#allocation6], %s30
      %s32 = sshll.u32 [#allocation5], 4
      %s33 = int_to_ptr.vmem [resolvable:$true] %s32
      %38 = dma.hbm_to_vmem [thread:$0]  %s1, 512, %s33, [#allocation6], 128, 128, 8
    $region9: #{tpu_custom_call.1} parent=1 // pred_fallthru
      _
    // Predicated region
    $region10: #{tpu_custom_call.1} parent=1 // pred_check
      _
    $region11: #{tpu_custom_call.1} parent=1 // pred_check_branch
      %40 = sbr.rel (0) target = $region13
    $region12: #{tpu_custom_call.1} parent=1 // pred_region
      %s42 = ssub.s32 512, 512
      %43 = vsyncadd [#allocation6], %s42
      %s44 = sshll.u32 [#allocation7], 4
      %s45 = int_to_ptr.vmem [resolvable:$true] %s44
      %50 = dma.hbm_to_vmem [thread:$0]  %s2, 512, %s45, [#allocation6], 128, 128, 8
    $region13: #{tpu_custom_call.1} parent=1 // pred_fallthru
      _
    // Predicated region
    $region14: #{tpu_custom_call.1} parent=1 // pred_check
      _
    $region15: #{tpu_custom_call.1} parent=1 // pred_check_branch
      %52 = sbr.rel (0) target = $region17
    $region16: #{tpu_custom_call.1} parent=1 // pred_region
      _
    $region17: #{tpu_custom_call.1} parent=1 // pred_fallthru
      _
    // Predicated region
    $region18: #{tpu_custom_call.1} parent=1 // pred_check
      _
    $region19: #{tpu_custom_call.1} parent=1 // pred_check_branch
      %54 = sbr.rel (0) target = $region21
    $region20: #{tpu_custom_call.1} parent=1 // pred_region
      %s56 = ssub.s32 1024, 1024
      %57 = vsyncadd [#allocation9], %s56
      %s58 = sshll.u32 [#allocation8], 4
      %s59 = int_to_ptr.vmem [resolvable:$true] %s58
      %64 = dma.hbm_to_vmem [thread:$0]  %s4, 1024, %s59, [#allocation9], 128, 128, 8
    $region21: #{tpu_custom_call.1} parent=1 // pred_fallthru
      _
    // Predicated region
    $region22: #{tpu_custom_call.1} parent=1 // pred_check
      _
    $region23: #{tpu_custom_call.1} parent=1 // pred_check_branch
      %66 = sbr.rel (0) target = $region25
    $region24: #{tpu_custom_call.1} parent=1 // pred_region
      _
    $region25: #{tpu_custom_call.1} parent=1 // pred_fallthru
      _
    // Predicated region
    $region26: #{tpu_custom_call.1} parent=1 // pred_check
      _
    $region27: #{tpu_custom_call.1} parent=1 // pred_check_branch
      %68 = sbr.rel (0) target = $region29
    $region28: #{tpu_custom_call.1} parent=1 // pred_region
      %69 = dma.done [#allocation3], 4096
    $region29: #{tpu_custom_call.1} parent=1 // pred_fallthru
      _
    // Predicated region
    $region30: #{tpu_custom_call.1} parent=1 // pred_check
      _
    $region31: #{tpu_custom_call.1} parent=1 // pred_check_branch
      %71 = sbr.rel (0) target = $region33
    $region32: #{tpu_custom_call.1} parent=1 // pred_region
      %72 = dma.done [#allocation6], 512
    $region33: #{tpu_custom_call.1} parent=1 // pred_fallthru
      _
    // Predicated region
    $region34: #{tpu_custom_call.1} parent=1 // pred_check
      _
    $region35: #{tpu_custom_call.1} parent=1 // pred_check_branch
      %74 = sbr.rel (0) target = $region37
    $region36: #{tpu_custom_call.1} parent=1 // pred_region
      %75 = dma.done [#allocation6], 512
    $region37: #{tpu_custom_call.1} parent=1 // pred_fallthru
      _
    // Predicated region
    $region38: #{tpu_custom_call.1} parent=1 // pred_check
      _
    $region39: #{tpu_custom_call.1} parent=1 // pred_check_branch
      %77 = sbr.rel (0) target = $region41
    $region40: #{tpu_custom_call.1} parent=1 // pred_region
      %78 = dma.done [#allocation9], 1024
    $region41: #{tpu_custom_call.1} parent=1 // pred_fallthru
      _
    %v79 = vld [vmem:[#allocation2] sm:$0xff]
    %v80 = vld [vmem:[#allocation2 + $0x8] sm:$0xff]
    %v81 = vld [vmem:[#allocation2 + $0x10] sm:$0xff]
    %v82 = vld [vmem:[#allocation2 + $0x18] sm:$0xff]
    %v83 = vld [vmem:[#allocation2 + $0x20] sm:$0xff]
    %v84 = vld [vmem:[#allocation2 + $0x28] sm:$0xff]
    %v85 = vld [vmem:[#allocation2 + $0x30] sm:$0xff]
    %v86 = vld [vmem:[#allocation2 + $0x38] sm:$0xff]
    %v87 = vld [vmem:[#allocation2 + $0x40] sm:$0xff]
    %v88 = vld [vmem:[#allocation2 + $0x48] sm:$0xff]
    %v89 = vld [vmem:[#allocation2 + $0x50] sm:$0xff]
    %v90 = vld [vmem:[#allocation2 + $0x58] sm:$0xff]
    %v91 = vld [vmem:[#allocation2 + $0x60] sm:$0xff]
    %v92 = vld [vmem:[#allocation2 + $0x68] sm:$0xff]
    %v93 = vld [vmem:[#allocation2 + $0x70] sm:$0xff]
    %v94 = vld [vmem:[#allocation2 + $0x78] sm:$0xff]
    %v95 = vld [vmem:[#allocation2 + $0x80] sm:$0xff]
    %v96 = vld [vmem:[#allocation2 + $0x88] sm:$0xff]
    %v97 = vld [vmem:[#allocation2 + $0x90] sm:$0xff]
    %v98 = vld [vmem:[#allocation2 + $0x98] sm:$0xff]
    %v99 = vld [vmem:[#allocation2 + $0xa0] sm:$0xff]
    %v100 = vld [vmem:[#allocation2 + $0xa8] sm:$0xff]
    %v101 = vld [vmem:[#allocation2 + $0xb0] sm:$0xff]
    %v102 = vld [vmem:[#allocation2 + $0xb8] sm:$0xff]
    %v103 = vld [vmem:[#allocation2 + $0xc0] sm:$0xff]
    %v104 = vld [vmem:[#allocation2 + $0xc8] sm:$0xff]
    %v105 = vld [vmem:[#allocation2 + $0xd0] sm:$0xff]
    %v106 = vld [vmem:[#allocation2 + $0xd8] sm:$0xff]
    %v107 = vld [vmem:[#allocation2 + $0xe0] sm:$0xff]
    %v108 = vld [vmem:[#allocation2 + $0xe8] sm:$0xff]
    %v109 = vld [vmem:[#allocation2 + $0xf0] sm:$0xff]
    %v110 = vld [vmem:[#allocation2 + $0xf8] sm:$0xff]
    %vm111 = vcmask 523264
    %v112 = vsel %vm111, %v79, 0.0
    %113 = vadd.xlane.f32.xlu0 %v112
    %v114 = vpop.xlane.xlu0 %113
    %v115 = vsel %vm111, %v80, 0.0
    %116 = vadd.xlane.f32.xlu0 %v115
    %v117 = vpop.xlane.xlu0 %116
    %v118 = vsel %vm111, %v81, 0.0
    %119 = vadd.xlane.f32.xlu0 %v118
    %v120 = vpop.xlane.xlu0 %119
    %v121 = vsel %vm111, %v82, 0.0
    %122 = vadd.xlane.f32.xlu0 %v121
    %v123 = vpop.xlane.xlu0 %122
    %v124 = vsel %vm111, %v83, 0.0
    %125 = vadd.xlane.f32.xlu0 %v124
    %v126 = vpop.xlane.xlu0 %125
    %v127 = vsel %vm111, %v84, 0.0
    %128 = vadd.xlane.f32.xlu0 %v127
    %v129 = vpop.xlane.xlu0 %128
    %v130 = vsel %vm111, %v85, 0.0
    %131 = vadd.xlane.f32.xlu0 %v130
    %v132 = vpop.xlane.xlu0 %131
    %v133 = vsel %vm111, %v86, 0.0
    %134 = vadd.xlane.f32.xlu0 %v133
    %v135 = vpop.xlane.xlu0 %134
    %v136 = vsel %vm111, %v87, 0.0
    %137 = vadd.xlane.f32.xlu0 %v136
    %v138 = vpop.xlane.xlu0 %137
    %v139 = vsel %vm111, %v88, 0.0
    %140 = vadd.xlane.f32.xlu0 %v139
    %v141 = vpop.xlane.xlu0 %140
    %v142 = vsel %vm111, %v89, 0.0
    %143 = vadd.xlane.f32.xlu0 %v142
    %v144 = vpop.xlane.xlu0 %143
    %v145 = vsel %vm111, %v90, 0.0
    %146 = vadd.xlane.f32.xlu0 %v145
    %v147 = vpop.xlane.xlu0 %146
    %v148 = vsel %vm111, %v91, 0.0
    %149 = vadd.xlane.f32.xlu0 %v148
    %v150 = vpop.xlane.xlu0 %149
    %v151 = vsel %vm111, %v92, 0.0
    %152 = vadd.xlane.f32.xlu0 %v151
    %v153 = vpop.xlane.xlu0 %152
    %v154 = vsel %vm111, %v93, 0.0
    %155 = vadd.xlane.f32.xlu0 %v154
    %v156 = vpop.xlane.xlu0 %155
    %v157 = vsel %vm111, %v94, 0.0
    %158 = vadd.xlane.f32.xlu0 %v157
    %v159 = vpop.xlane.xlu0 %158
    %v160 = vsel %vm111, %v95, 0.0
    %161 = vadd.xlane.f32.xlu0 %v160
    %v162 = vpop.xlane.xlu0 %161
    %v163 = vsel %vm111, %v96, 0.0
    %164 = vadd.xlane.f32.xlu0 %v163
    %v165 = vpop.xlane.xlu0 %164
    %v166 = vsel %vm111, %v97, 0.0
    %167 = vadd.xlane.f32.xlu0 %v166
    %v168 = vpop.xlane.xlu0 %167
    %v169 = vsel %vm111, %v98, 0.0
    %170 = vadd.xlane.f32.xlu0 %v169
    %v171 = vpop.xlane.xlu0 %170
    %v172 = vsel %vm111, %v99, 0.0
    %173 = vadd.xlane.f32.xlu0 %v172
    %v174 = vpop.xlane.xlu0 %173
    %v175 = vsel %vm111, %v100, 0.0
    %176 = vadd.xlane.f32.xlu0 %v175
    %v177 = vpop.xlane.xlu0 %176
    %v178 = vsel %vm111, %v101, 0.0
    %179 = vadd.xlane.f32.xlu0 %v178
    %v180 = vpop.xlane.xlu0 %179
    %v181 = vsel %vm111, %v102, 0.0
    %182 = vadd.xlane.f32.xlu0 %v181
    %v183 = vpop.xlane.xlu0 %182
    %v184 = vsel %vm111, %v103, 0.0
    %185 = vadd.xlane.f32.xlu0 %v184
    %v186 = vpop.xlane.xlu0 %185
    %v187 = vsel %vm111, %v104, 0.0
    %188 = vadd.xlane.f32.xlu0 %v187
    %v189 = vpop.xlane.xlu0 %188
    %v190 = vsel %vm111, %v105, 0.0
    %191 = vadd.xlane.f32.xlu0 %v190
    %v192 = vpop.xlane.xlu0 %191
    %v193 = vsel %vm111, %v106, 0.0
    %194 = vadd.xlane.f32.xlu0 %v193
    %v195 = vpop.xlane.xlu0 %194
    %v196 = vsel %vm111, %v107, 0.0
    %197 = vadd.xlane.f32.xlu0 %v196
    %v198 = vpop.xlane.xlu0 %197
    %v199 = vsel %vm111, %v108, 0.0
    %200 = vadd.xlane.f32.xlu0 %v199
    %v201 = vpop.xlane.xlu0 %200
    %v202 = vsel %vm111, %v109, 0.0
    %203 = vadd.xlane.f32.xlu0 %v202
    %v204 = vpop.xlane.xlu0 %203
    %v205 = vsel %vm111, %v110, 0.0
    %206 = vadd.xlane.f32.xlu0 %v205
    %v207 = vpop.xlane.xlu0 %206
    %v208 = vmul.f32 %v114, 0.015625
    %v209 = vmul.f32 %v117, 0.015625
    %v210 = vmul.f32 %v120, 0.015625
    %v211 = vmul.f32 %v123, 0.015625
    %v212 = vmul.f32 %v126, 0.015625
    %v213 = vmul.f32 %v129, 0.015625
    %v214 = vmul.f32 %v132, 0.015625
    %v215 = vmul.f32 %v135, 0.015625
    %v216 = vmul.f32 %v138, 0.015625
    %v217 = vmul.f32 %v141, 0.015625
    %v218 = vmul.f32 %v144, 0.015625
    %v219 = vmul.f32 %v147, 0.015625
    %v220 = vmul.f32 %v150, 0.015625
    %v221 = vmul.f32 %v153, 0.015625
    %v222 = vmul.f32 %v156, 0.015625
    %v223 = vmul.f32 %v159, 0.015625
    %v224 = vmul.f32 %v162, 0.015625
    %v225 = vmul.f32 %v165, 0.015625
    %v226 = vmul.f32 %v168, 0.015625
    %v227 = vmul.f32 %v171, 0.015625
    %v228 = vmul.f32 %v174, 0.015625
    %v229 = vmul.f32 %v177, 0.015625
    %v230 = vmul.f32 %v180, 0.015625
    %v231 = vmul.f32 %v183, 0.015625
    %v232 = vmul.f32 %v186, 0.015625
    %v233 = vmul.f32 %v189, 0.015625
    %v234 = vmul.f32 %v192, 0.015625
    %v235 = vmul.f32 %v195, 0.015625
    %v236 = vmul.f32 %v198, 0.015625
    %v237 = vmul.f32 %v201, 0.015625
    %v238 = vmul.f32 %v204, 0.015625
    %v239 = vmul.f32 %v207, 0.015625
    %v240 = vsel %vm111, %v79, -inf
    %241 = vmax.xlane.f32.xlu0 %v240
    %v242 = vpop.xlane.xlu0 %241
    %v243 = vsel %vm111, %v80, -inf
    %244 = vmax.xlane.f32.xlu0 %v243
    %v245 = vpop.xlane.xlu0 %244
    %v246 = vsel %vm111, %v81, -inf
    %247 = vmax.xlane.f32.xlu0 %v246
    %v248 = vpop.xlane.xlu0 %247
    %v249 = vsel %vm111, %v82, -inf
    %250 = vmax.xlane.f32.xlu0 %v249
    %v251 = vpop.xlane.xlu0 %250
    %v252 = vsel %vm111, %v83, -inf
    %253 = vmax.xlane.f32.xlu0 %v252
    %v254 = vpop.xlane.xlu0 %253
    %v255 = vsel %vm111, %v84, -inf
    %256 = vmax.xlane.f32.xlu0 %v255
    %v257 = vpop.xlane.xlu0 %256
    %v258 = vsel %vm111, %v85, -inf
    %259 = vmax.xlane.f32.xlu0 %v258
    %v260 = vpop.xlane.xlu0 %259
    %v261 = vsel %vm111, %v86, -inf
    %262 = vmax.xlane.f32.xlu0 %v261
    %v263 = vpop.xlane.xlu0 %262
    %v264 = vsel %vm111, %v87, -inf
    %265 = vmax.xlane.f32.xlu0 %v264
    %v266 = vpop.xlane.xlu0 %265
    %v267 = vsel %vm111, %v88, -inf
    %268 = vmax.xlane.f32.xlu0 %v267
    %v269 = vpop.xlane.xlu0 %268
    %v270 = vsel %vm111, %v89, -inf
    %271 = vmax.xlane.f32.xlu0 %v270
    %v272 = vpop.xlane.xlu0 %271
    %v273 = vsel %vm111, %v90, -inf
    %274 = vmax.xlane.f32.xlu0 %v273
    %v275 = vpop.xlane.xlu0 %274
    %v276 = vsel %vm111, %v91, -inf
    %277 = vmax.xlane.f32.xlu0 %v276
    %v278 = vpop.xlane.xlu0 %277
    %v279 = vsel %vm111, %v92, -inf
    %280 = vmax.xlane.f32.xlu0 %v279
    %v281 = vpop.xlane.xlu0 %280
    %v282 = vsel %vm111, %v93, -inf
    %283 = vmax.xlane.f32.xlu0 %v282
    %v284 = vpop.xlane.xlu0 %283
    %v285 = vsel %vm111, %v94, -inf
    %286 = vmax.xlane.f32.xlu0 %v285
    %v287 = vpop.xlane.xlu0 %286
    %v288 = vsel %vm111, %v95, -inf
    %289 = vmax.xlane.f32.xlu0 %v288
    %v290 = vpop.xlane.xlu0 %289
    %v291 = vsel %vm111, %v96, -inf
    %292 = vmax.xlane.f32.xlu0 %v291
    %v293 = vpop.xlane.xlu0 %292
    %v294 = vsel %vm111, %v97, -inf
    %295 = vmax.xlane.f32.xlu0 %v294
    %v296 = vpop.xlane.xlu0 %295
    %v297 = vsel %vm111, %v98, -inf
    %298 = vmax.xlane.f32.xlu0 %v297
    %v299 = vpop.xlane.xlu0 %298
    %v300 = vsel %vm111, %v99, -inf
    %301 = vmax.xlane.f32.xlu0 %v300
    %v302 = vpop.xlane.xlu0 %301
    %v303 = vsel %vm111, %v100, -inf
    %304 = vmax.xlane.f32.xlu0 %v303
    %v305 = vpop.xlane.xlu0 %304
    %v306 = vsel %vm111, %v101, -inf
    %307 = vmax.xlane.f32.xlu0 %v306
    %v308 = vpop.xlane.xlu0 %307
    %v309 = vsel %vm111, %v102, -inf
    %310 = vmax.xlane.f32.xlu0 %v309
    %v311 = vpop.xlane.xlu0 %310
    %v312 = vsel %vm111, %v103, -inf
    %313 = vmax.xlane.f32.xlu0 %v312
    %v314 = vpop.xlane.xlu0 %313
    %v315 = vsel %vm111, %v104, -inf
    %316 = vmax.xlane.f32.xlu0 %v315
    %v317 = vpop.xlane.xlu0 %316
    %v318 = vsel %vm111, %v105, -inf
    %319 = vmax.xlane.f32.xlu0 %v318
    %v320 = vpop.xlane.xlu0 %319
    %v321 = vsel %vm111, %v106, -inf
    %322 = vmax.xlane.f32.xlu0 %v321
    %v323 = vpop.xlane.xlu0 %322
    %v324 = vsel %vm111, %v107, -inf
    %325 = vmax.xlane.f32.xlu0 %v324
    %v326 = vpop.xlane.xlu0 %325
    %v327 = vsel %vm111, %v108, -inf
    %328 = vmax.xlane.f32.xlu0 %v327
    %v329 = vpop.xlane.xlu0 %328
    %v330 = vsel %vm111, %v109, -inf
    %331 = vmax.xlane.f32.xlu0 %v330
    %v332 = vpop.xlane.xlu0 %331
    %v333 = vsel %vm111, %v110, -inf
    %334 = vmax.xlane.f32.xlu0 %v333
    %v335 = vpop.xlane.xlu0 %334
    %v336 = vld [vmem:[#allocation5] sm:$0xff]
    %v337 = vld [vmem:[#allocation5 + $0x8] sm:$0xff]
    %v338 = vld [vmem:[#allocation5 + $0x10] sm:$0xff]
    %v339 = vld [vmem:[#allocation5 + $0x18] sm:$0xff]
    %v340 = vld [vmem:[#allocation7] sm:$0xff]
    %v341 = vld [vmem:[#allocation7 + $0x8] sm:$0xff]
    %v342 = vld [vmem:[#allocation7 + $0x10] sm:$0xff]
    %v343 = vld [vmem:[#allocation7 + $0x18] sm:$0xff]
    %v376 = vlaneseq
    %v377 = vand.u32 %v376, 127
    %v378 = vlaneseq
    %v379 = vshrl.u32 %v378, 7
    %v380 = vsub.s32 %v377, %v379
    %v381 = vrot.slane %v242, %v380
    %v382 = vadd.s32 %v377, 4294967288
    %v383 = vlaneseq
    %v384 = vshrl.u32 %v383, 7
    %v385 = vsub.s32 %v382, %v384
    %v386 = vrot.slane %v245, %v385
    %vm387 = vcmask 130112
    %v388 = vsel %vm387, %v386, %v381
    %v389 = vadd.s32 %v377, 4294967280
    %v390 = vlaneseq
    %v391 = vshrl.u32 %v390, 7
    %v392 = vsub.s32 %v389, %v391
    %v393 = vrot.slane %v248, %v392
    %vm394 = vcmask 195712
    %v395 = vsel %vm394, %v393, %v388
    %v396 = vadd.s32 %v377, 4294967272
    %v397 = vlaneseq
    %v398 = vshrl.u32 %v397, 7
    %v399 = vsub.s32 %v396, %v398
    %v400 = vrot.slane %v251, %v399
    %vm401 = vcmask 261312
    %v402 = vsel %vm401, %v400, %v395
    %v403 = vlaneseq
    %v404 = vshrl.u32 %v403, 7
    %v405 = vsub.s32 %v377, %v404
    %v406 = vrot.slane %v254, %v405
    %v407 = vlaneseq
    %v408 = vshrl.u32 %v407, 7
    %v409 = vsub.s32 %v382, %v408
    %v410 = vrot.slane %v257, %v409
    %v411 = vsel %vm387, %v410, %v406
    %v412 = vlaneseq
    %v413 = vshrl.u32 %v412, 7
    %v414 = vsub.s32 %v389, %v413
    %v415 = vrot.slane %v260, %v414
    %v416 = vsel %vm394, %v415, %v411
    %v417 = vlaneseq
    %v418 = vshrl.u32 %v417, 7
    %v419 = vsub.s32 %v396, %v418
    %v420 = vrot.slane %v263, %v419
    %v421 = vsel %vm401, %v420, %v416
    %v422 = vlaneseq
    %v423 = vshrl.u32 %v422, 7
    %v424 = vsub.s32 %v377, %v423
    %v425 = vrot.slane %v266, %v424
    %v426 = vlaneseq
    %v427 = vshrl.u32 %v426, 7
    %v428 = vsub.s32 %v382, %v427
    %v429 = vrot.slane %v269, %v428
    %v430 = vsel %vm387, %v429, %v425
    %v431 = vlaneseq
    %v432 = vshrl.u32 %v431, 7
    %v433 = vsub.s32 %v389, %v432
    %v434 = vrot.slane %v272, %v433
    %v435 = vsel %vm394, %v434, %v430
    %v436 = vlaneseq
    %v437 = vshrl.u32 %v436, 7
    %v438 = vsub.s32 %v396, %v437
    %v439 = vrot.slane %v275, %v438
    %v440 = vsel %vm401, %v439, %v435
    %v441 = vlaneseq
    %v442 = vshrl.u32 %v441, 7
    %v443 = vsub.s32 %v377, %v442
    %v444 = vrot.slane %v278, %v443
    %v445 = vlaneseq
    %v446 = vshrl.u32 %v445, 7
    %v447 = vsub.s32 %v382, %v446
    %v448 = vrot.slane %v281, %v447
    %v449 = vsel %vm387, %v448, %v444
    %v450 = vlaneseq
    %v451 = vshrl.u32 %v450, 7
    %v452 = vsub.s32 %v389, %v451
    %v453 = vrot.slane %v284, %v452
    %v454 = vsel %vm394, %v453, %v449
    %v455 = vlaneseq
    %v456 = vshrl.u32 %v455, 7
    %v457 = vsub.s32 %v396, %v456
    %v458 = vrot.slane %v287, %v457
    %v459 = vsel %vm401, %v458, %v454
    %v460 = vlaneseq
    %v461 = vshrl.u32 %v460, 7
    %v462 = vsub.s32 %v377, %v461
    %v463 = vrot.slane %v290, %v462
    %v464 = vlaneseq
    %v465 = vshrl.u32 %v464, 7
    %v466 = vsub.s32 %v382, %v465
    %v467 = vrot.slane %v293, %v466
    %v468 = vsel %vm387, %v467, %v463
    %v469 = vlaneseq
    %v470 = vshrl.u32 %v469, 7
    %v471 = vsub.s32 %v389, %v470
    %v472 = vrot.slane %v296, %v471
    %v473 = vsel %vm394, %v472, %v468
    %v474 = vlaneseq
    %v475 = vshrl.u32 %v474, 7
    %v476 = vsub.s32 %v396, %v475
    %v477 = vrot.slane %v299, %v476
    %v478 = vsel %vm401, %v477, %v473
    %v479 = vlaneseq
    %v480 = vshrl.u32 %v479, 7
    %v481 = vsub.s32 %v377, %v480
    %v482 = vrot.slane %v302, %v481
    %v483 = vlaneseq
    %v484 = vshrl.u32 %v483, 7
    %v485 = vsub.s32 %v382, %v484
    %v486 = vrot.slane %v305, %v485
    %v487 = vsel %vm387, %v486, %v482
    %v488 = vlaneseq
    %v489 = vshrl.u32 %v488, 7
    %v490 = vsub.s32 %v389, %v489
    %v491 = vrot.slane %v308, %v490
    %v492 = vsel %vm394, %v491, %v487
    %v493 = vlaneseq
    %v494 = vshrl.u32 %v493, 7
    %v495 = vsub.s32 %v396, %v494
    %v496 = vrot.slane %v311, %v495
    %v497 = vsel %vm401, %v496, %v492
    %v498 = vlaneseq
    %v499 = vshrl.u32 %v498, 7
    %v500 = vsub.s32 %v377, %v499
    %v501 = vrot.slane %v314, %v500
    %v502 = vlaneseq
    %v503 = vshrl.u32 %v502, 7
    %v504 = vsub.s32 %v382, %v503
    %v505 = vrot.slane %v317, %v504
    %v506 = vsel %vm387, %v505, %v501
    %v507 = vlaneseq
    %v508 = vshrl.u32 %v507, 7
    %v509 = vsub.s32 %v389, %v508
    %v510 = vrot.slane %v320, %v509
    %v511 = vsel %vm394, %v510, %v506
    %v512 = vlaneseq
    %v513 = vshrl.u32 %v512, 7
    %v514 = vsub.s32 %v396, %v513
    %v515 = vrot.slane %v323, %v514
    %v516 = vsel %vm401, %v515, %v511
    %v517 = vlaneseq
    %v518 = vshrl.u32 %v517, 7
    %v519 = vsub.s32 %v377, %v518
    %v520 = vrot.slane %v326, %v519
    %v521 = vlaneseq
    %v522 = vshrl.u32 %v521, 7
    %v523 = vsub.s32 %v382, %v522
    %v524 = vrot.slane %v329, %v523
    %v525 = vsel %vm387, %v524, %v520
    %v526 = vlaneseq
    %v527 = vshrl.u32 %v526, 7
    %v528 = vsub.s32 %v389, %v527
    %v529 = vrot.slane %v332, %v528
    %v530 = vsel %vm394, %v529, %v525
    %v531 = vlaneseq
    %v532 = vshrl.u32 %v531, 7
    %v533 = vsub.s32 %v396, %v532
    %v534 = vrot.slane %v335, %v533
    %v535 = vsel %vm401, %v534, %v530
    %vm536 = vcmask 1041409
    %v537 = vsel %vm536, %v421, %v402
    %vm538 = vcmask 1042434
    %v539 = vsel %vm538, %v440, %v537
    %vm540 = vcmask 1043459
    %v541 = vsel %vm540, %v459, %v539
    %vm542 = vcmask 1044484
    %v543 = vsel %vm542, %v478, %v541
    %vm544 = vcmask 1045509
    %v545 = vsel %vm544, %v497, %v543
    %vm546 = vcmask 1046534
    %v547 = vsel %vm546, %v516, %v545
    %vm548 = vcmask 1047559
    %v549 = vsel %vm548, %v535, %v547
    %vm550 = vcmask 261120
    %v551 = vsel %vm550, %v549, 0
    %553 = vmatprep.subr.mxu0 0.0
    %554 = vmatpush1.msra.mxu0 0.0
    %555 = vmatprep.subr.mxu0 0.0
    %556 = vmatpush1.msra.mxu0 0.0
    %557 = vmatprep.subr.mxu0 0.0
    %558 = vmatpush1.msra.mxu0 0.0
    %559 = vmatprep.subr.mxu0 0.0
    %560 = vmatpush1.msra.mxu0 0.0
    %561 = vmatprep.subr.mxu0 0.0
    %562 = vmatpush1.msra.mxu0 0.0
    %563 = vmatprep.subr.mxu0 0.0
    %564 = vmatpush1.msra.mxu0 0.0
    %565 = vmatprep.subr.mxu0 0.0
    %566 = vmatpush1.msra.mxu0 0.0
    %567 = vmatprep.subr.mxu0 0.0
    %568 = vmatpush1.msra.mxu0 0.0
    %569 = vmatprep.subr.mxu0 0.0
    %570 = vmatpush1.msra.mxu0 0.0
    %571 = vmatprep.subr.mxu0 0.0
    %572 = vmatpush1.msra.mxu0 0.0
    %573 = vmatprep.subr.mxu0 0.0
    %574 = vmatpush1.msra.mxu0 0.0
    %575 = vmatprep.subr.mxu0 0.0
    %576 = vmatpush1.msra.mxu0 0.0
    %577 = vmatprep.subr.mxu0 0.0
    %578 = vmatpush1.msra.mxu0 %v343
    %579 = vmatprep.subr.mxu0 0.0
    %580 = vmatpush1.msra.mxu0 %v342
    %581 = vmatprep.subr.mxu0 0.0
    %582 = vmatpush1.msra.mxu0 %v341
    %583 = vmatprep.subr.mxu0 0.0
    %584 = vmatpush1.msra.mxu0 %v340
    %585 = vmatprep.subr.mxu0 0.0
    %586 = vmatpush2.msra.mxu0 0.0
    %587 = vmatprep.subr.mxu0 0.0
    %588 = vmatpush2.msra.mxu0 0.0
    %589 = vmatprep.subr.mxu0 0.0
    %590 = vmatpush2.msra.mxu0 0.0
    %591 = vmatprep.subr.mxu0 0.0
    %592 = vmatpush2.msra.mxu0 0.0
    %593 = vmatprep.subr.mxu0 0.0
    %594 = vmatpush2.msra.mxu0 0.0
    %595 = vmatprep.subr.mxu0 0.0
    %596 = vmatpush2.msra.mxu0 0.0
    %597 = vmatprep.subr.mxu0 0.0
    %598 = vmatpush2.msra.mxu0 0.0
    %599 = vmatprep.subr.mxu0 0.0
    %600 = vmatpush2.msra.mxu0 0.0
    %601 = vmatprep.subr.mxu0 0.0
    %602 = vmatpush2.msra.mxu0 0.0
    %603 = vmatprep.subr.mxu0 0.0
    %604 = vmatpush2.msra.mxu0 0.0
    %605 = vmatprep.subr.mxu0 0.0
    %606 = vmatpush2.msra.mxu0 0.0
    %607 = vmatprep.subr.mxu0 0.0
    %608 = vmatpush2.msra.mxu0 0.0
    %609 = vmatprep.subr.mxu0 0.0
    %610 = vmatpush2.msra.mxu0 0.0
    %611 = vmatprep.subr.mxu0 0.0
    %612 = vmatpush2.msra.mxu0 0.0
    %613 = vmatprep.subr.mxu0 0.0
    %614 = vmatpush2.msra.mxu0 0.0
    %615 = vmatprep.subr.mxu0 0.0
    %616 = vmatpush2.msra.mxu0 0.0
    %617 = vmatprep.mubr.f32.mxu0 0.0
    %618 = vmatmul.mubr.f32.gmra.mxu0 %v551
    %v619 = vpop.f32.mrf.mxu0
    %v620 = vadd.f32 0.0, %v619
    %v621 = vpop.f32.mrf.mxu0
    %622 = vdwg.mxu0
    %v655 = vlaneseq
    %v656 = vshrl.u32 %v655, 7
    %v657 = vsub.s32 %v377, %v656
    %v658 = vrot.slane %v208, %v657
    %v659 = vlaneseq
    %v660 = vshrl.u32 %v659, 7
    %v661 = vsub.s32 %v382, %v660
    %v662 = vrot.slane %v209, %v661
    %v663 = vsel %vm387, %v662, %v658
    %v664 = vlaneseq
    %v665 = vshrl.u32 %v664, 7
    %v666 = vsub.s32 %v389, %v665
    %v667 = vrot.slane %v210, %v666
    %v668 = vsel %vm394, %v667, %v663
    %v669 = vlaneseq
    %v670 = vshrl.u32 %v669, 7
    %v671 = vsub.s32 %v396, %v670
    %v672 = vrot.slane %v211, %v671
    %v673 = vsel %vm401, %v672, %v668
    %v674 = vlaneseq
    %v675 = vshrl.u32 %v674, 7
    %v676 = vsub.s32 %v377, %v675
    %v677 = vrot.slane %v212, %v676
    %v678 = vlaneseq
    %v679 = vshrl.u32 %v678, 7
    %v680 = vsub.s32 %v382, %v679
    %v681 = vrot.slane %v213, %v680
    %v682 = vsel %vm387, %v681, %v677
    %v683 = vlaneseq
    %v684 = vshrl.u32 %v683, 7
    %v685 = vsub.s32 %v389, %v684
    %v686 = vrot.slane %v214, %v685
    %v687 = vsel %vm394, %v686, %v682
    %v688 = vlaneseq
    %v689 = vshrl.u32 %v688, 7
    %v690 = vsub.s32 %v396, %v689
    %v691 = vrot.slane %v215, %v690
    %v692 = vsel %vm401, %v691, %v687
    %v693 = vlaneseq
    %v694 = vshrl.u32 %v693, 7
    %v695 = vsub.s32 %v377, %v694
    %v696 = vrot.slane %v216, %v695
    %v697 = vlaneseq
    %v698 = vshrl.u32 %v697, 7
    %v699 = vsub.s32 %v382, %v698
    %v700 = vrot.slane %v217, %v699
    %v701 = vsel %vm387, %v700, %v696
    %v702 = vlaneseq
    %v703 = vshrl.u32 %v702, 7
    %v704 = vsub.s32 %v389, %v703
    %v705 = vrot.slane %v218, %v704
    %v706 = vsel %vm394, %v705, %v701
    %v707 = vlaneseq
    %v708 = vshrl.u32 %v707, 7
    %v709 = vsub.s32 %v396, %v708
    %v710 = vrot.slane %v219, %v709
    %v711 = vsel %vm401, %v710, %v706
    %v712 = vlaneseq
    %v713 = vshrl.u32 %v712, 7
    %v714 = vsub.s32 %v377, %v713
    %v715 = vrot.slane %v220, %v714
    %v716 = vlaneseq
    %v717 = vshrl.u32 %v716, 7
    %v718 = vsub.s32 %v382, %v717
    %v719 = vrot.slane %v221, %v718
    %v720 = vsel %vm387, %v719, %v715
    %v721 = vlaneseq
    %v722 = vshrl.u32 %v721, 7
    %v723 = vsub.s32 %v389, %v722
    %v724 = vrot.slane %v222, %v723
    %v725 = vsel %vm394, %v724, %v720
    %v726 = vlaneseq
    %v727 = vshrl.u32 %v726, 7
    %v728 = vsub.s32 %v396, %v727
    %v729 = vrot.slane %v223, %v728
    %v730 = vsel %vm401, %v729, %v725
    %v731 = vlaneseq
    %v732 = vshrl.u32 %v731, 7
    %v733 = vsub.s32 %v377, %v732
    %v734 = vrot.slane %v224, %v733
    %v735 = vlaneseq
    %v736 = vshrl.u32 %v735, 7
    %v737 = vsub.s32 %v382, %v736
    %v738 = vrot.slane %v225, %v737
    %v739 = vsel %vm387, %v738, %v734
    %v740 = vlaneseq
    %v741 = vshrl.u32 %v740, 7
    %v742 = vsub.s32 %v389, %v741
    %v743 = vrot.slane %v226, %v742
    %v744 = vsel %vm394, %v743, %v739
    %v745 = vlaneseq
    %v746 = vshrl.u32 %v745, 7
    %v747 = vsub.s32 %v396, %v746
    %v748 = vrot.slane %v227, %v747
    %v749 = vsel %vm401, %v748, %v744
    %v750 = vlaneseq
    %v751 = vshrl.u32 %v750, 7
    %v752 = vsub.s32 %v377, %v751
    %v753 = vrot.slane %v228, %v752
    %v754 = vlaneseq
    %v755 = vshrl.u32 %v754, 7
    %v756 = vsub.s32 %v382, %v755
    %v757 = vrot.slane %v229, %v756
    %v758 = vsel %vm387, %v757, %v753
    %v759 = vlaneseq
    %v760 = vshrl.u32 %v759, 7
    %v761 = vsub.s32 %v389, %v760
    %v762 = vrot.slane %v230, %v761
    %v763 = vsel %vm394, %v762, %v758
    %v764 = vlaneseq
    %v765 = vshrl.u32 %v764, 7
    %v766 = vsub.s32 %v396, %v765
    %v767 = vrot.slane %v231, %v766
    %v768 = vsel %vm401, %v767, %v763
    %v769 = vlaneseq
    %v770 = vshrl.u32 %v769, 7
    %v771 = vsub.s32 %v377, %v770
    %v772 = vrot.slane %v232, %v771
    %v773 = vlaneseq
    %v774 = vshrl.u32 %v773, 7
    %v775 = vsub.s32 %v382, %v774
    %v776 = vrot.slane %v233, %v775
    %v777 = vsel %vm387, %v776, %v772
    %v778 = vlaneseq
    %v779 = vshrl.u32 %v778, 7
    %v780 = vsub.s32 %v389, %v779
    %v781 = vrot.slane %v234, %v780
    %v782 = vsel %vm394, %v781, %v777
    %v783 = vlaneseq
    %v784 = vshrl.u32 %v783, 7
    %v785 = vsub.s32 %v396, %v784
    %v786 = vrot.slane %v235, %v785
    %v787 = vsel %vm401, %v786, %v782
    %v788 = vlaneseq
    %v789 = vshrl.u32 %v788, 7
    %v790 = vsub.s32 %v377, %v789
    %v791 = vrot.slane %v236, %v790
    %v792 = vlaneseq
    %v793 = vshrl.u32 %v792, 7
    %v794 = vsub.s32 %v382, %v793
    %v795 = vrot.slane %v237, %v794
    %v796 = vsel %vm387, %v795, %v791
    %v797 = vlaneseq
    %v798 = vshrl.u32 %v797, 7
    %v799 = vsub.s32 %v389, %v798
    %v800 = vrot.slane %v238, %v799
    %v801 = vsel %vm394, %v800, %v796
    %v802 = vlaneseq
    %v803 = vshrl.u32 %v802, 7
    %v804 = vsub.s32 %v396, %v803
    %v805 = vrot.slane %v239, %v804
    %v806 = vsel %vm401, %v805, %v801
    %v807 = vsel %vm536, %v692, %v673
    %v808 = vsel %vm538, %v711, %v807
    %v809 = vsel %vm540, %v730, %v808
    %v810 = vsel %vm542, %v749, %v809
    %v811 = vsel %vm544, %v768, %v810
    %v812 = vsel %vm546, %v787, %v811
    %v813 = vsel %vm548, %v806, %v812
    %v814 = vsel %vm550, %v813, 0
    %816 = vmatprep.subr.mxu0 0.0
    %817 = vmatpush1.msra.mxu0 0.0
    %818 = vmatprep.subr.mxu0 0.0
    %819 = vmatpush1.msra.mxu0 0.0
    %820 = vmatprep.subr.mxu0 0.0
    %821 = vmatpush1.msra.mxu0 0.0
    %822 = vmatprep.subr.mxu0 0.0
    %823 = vmatpush1.msra.mxu0 0.0
    %824 = vmatprep.subr.mxu0 0.0
    %825 = vmatpush1.msra.mxu0 0.0
    %826 = vmatprep.subr.mxu0 0.0
    %827 = vmatpush1.msra.mxu0 0.0
    %828 = vmatprep.subr.mxu0 0.0
    %829 = vmatpush1.msra.mxu0 0.0
    %830 = vmatprep.subr.mxu0 0.0
    %831 = vmatpush1.msra.mxu0 0.0
    %832 = vmatprep.subr.mxu0 0.0
    %833 = vmatpush1.msra.mxu0 0.0
    %834 = vmatprep.subr.mxu0 0.0
    %835 = vmatpush1.msra.mxu0 0.0
    %836 = vmatprep.subr.mxu0 0.0
    %837 = vmatpush1.msra.mxu0 0.0
    %838 = vmatprep.subr.mxu0 0.0
    %839 = vmatpush1.msra.mxu0 0.0
    %840 = vmatprep.subr.mxu0 0.0
    %841 = vmatpush1.msra.mxu0 %v339
    %842 = vmatprep.subr.mxu0 0.0
    %843 = vmatpush1.msra.mxu0 %v338
    %844 = vmatprep.subr.mxu0 0.0
    %845 = vmatpush1.msra.mxu0 %v337
    %846 = vmatprep.subr.mxu0 0.0
    %847 = vmatpush1.msra.mxu0 %v336
    %848 = vmatprep.subr.mxu0 0.0
    %849 = vmatpush2.msra.mxu0 0.0
    %850 = vmatprep.subr.mxu0 0.0
    %851 = vmatpush2.msra.mxu0 0.0
    %852 = vmatprep.subr.mxu0 0.0
    %853 = vmatpush2.msra.mxu0 0.0
    %854 = vmatprep.subr.mxu0 0.0
    %855 = vmatpush2.msra.mxu0 0.0
    %856 = vmatprep.subr.mxu0 0.0
    %857 = vmatpush2.msra.mxu0 0.0
    %858 = vmatprep.subr.mxu0 0.0
    %859 = vmatpush2.msra.mxu0 0.0
    %860 = vmatprep.subr.mxu0 0.0
    %861 = vmatpush2.msra.mxu0 0.0
    %862 = vmatprep.subr.mxu0 0.0
    %863 = vmatpush2.msra.mxu0 0.0
    %864 = vmatprep.subr.mxu0 0.0
    %865 = vmatpush2.msra.mxu0 0.0
    %866 = vmatprep.subr.mxu0 0.0
    %867 = vmatpush2.msra.mxu0 0.0
    %868 = vmatprep.subr.mxu0 0.0
    %869 = vmatpush2.msra.mxu0 0.0
    %870 = vmatprep.subr.mxu0 0.0
    %871 = vmatpush2.msra.mxu0 0.0
    %872 = vmatprep.subr.mxu0 0.0
    %873 = vmatpush2.msra.mxu0 0.0
    %874 = vmatprep.subr.mxu0 0.0
    %875 = vmatpush2.msra.mxu0 0.0
    %876 = vmatprep.subr.mxu0 0.0
    %877 = vmatpush2.msra.mxu0 0.0
    %878 = vmatprep.subr.mxu0 0.0
    %879 = vmatpush2.msra.mxu0 0.0
    %880 = vmatprep.mubr.f32.mxu0 0.0
    %881 = vmatmul.mubr.f32.gmra.mxu0 %v814
    %v882 = vpop.f32.mrf.mxu0
    %v883 = vadd.f32 %v620, %v882
    %v884 = vpop.f32.mrf.mxu0
    %885 = vdwg.mxu0
    %v886 = vld [vmem:[%s3] sm:$0x1]
    %v888 = vlaneseq
    %v889 = vshrl.u32 %v888, 7
    %v890 = vsub.s32 0, %v889
    %v891 = vrot.slane %v886, %v890
    %v893 = vadd.f32 %v883, %v891
    %v894 = vmax.f32 %v893, 0.0
    %v895 = vld [vmem:[#allocation8] sm:$0xff]
    %v896 = vld [vmem:[#allocation8 + $0x8] sm:$0xff]
    %v897 = vld [vmem:[#allocation8 + $0x10] sm:$0xff]
    %v898 = vld [vmem:[#allocation8 + $0x18] sm:$0xff]
    %v899 = vld [vmem:[#allocation8 + $0x20] sm:$0xff]
    %v900 = vld [vmem:[#allocation8 + $0x28] sm:$0xff]
    %v901 = vld [vmem:[#allocation8 + $0x30] sm:$0xff]
    %v902 = vld [vmem:[#allocation8 + $0x38] sm:$0xff]
    %v903 = vld [vmem:[%s5] sm:$0x1]
    %v905 = vlaneseq
    %v906 = vshrl.u32 %v905, 7
    %v907 = vsub.s32 0, %v906
    %v908 = vrot.slane %v903, %v907
    %v911 = vsel %vm111, %v894, 0
    %913 = vmatprep.subr.mxu0 0.0
    %914 = vmatpush1.msra.mxu0 0.0
    %915 = vmatprep.subr.mxu0 0.0
    %916 = vmatpush1.msra.mxu0 0.0
    %917 = vmatprep.subr.mxu0 0.0
    %918 = vmatpush1.msra.mxu0 0.0
    %919 = vmatprep.subr.mxu0 0.0
    %920 = vmatpush1.msra.mxu0 0.0
    %921 = vmatprep.subr.mxu0 0.0
    %922 = vmatpush1.msra.mxu0 0.0
    %923 = vmatprep.subr.mxu0 0.0
    %924 = vmatpush1.msra.mxu0 0.0
    %925 = vmatprep.subr.mxu0 0.0
    %926 = vmatpush1.msra.mxu0 0.0
    %927 = vmatprep.subr.mxu0 0.0
    %928 = vmatpush1.msra.mxu0 0.0
    %929 = vmatprep.subr.mxu0 0.0
    %930 = vmatpush1.msra.mxu0 %v902
    %931 = vmatprep.subr.mxu0 0.0
    %932 = vmatpush1.msra.mxu0 %v901
    %933 = vmatprep.subr.mxu0 0.0
    %934 = vmatpush1.msra.mxu0 %v900
    %935 = vmatprep.subr.mxu0 0.0
    %936 = vmatpush1.msra.mxu0 %v899
    %937 = vmatprep.subr.mxu0 0.0
    %938 = vmatpush1.msra.mxu0 %v898
    %939 = vmatprep.subr.mxu0 0.0
    %940 = vmatpush1.msra.mxu0 %v897
    %941 = vmatprep.subr.mxu0 0.0
    %942 = vmatpush1.msra.mxu0 %v896
    %943 = vmatprep.subr.mxu0 0.0
    %944 = vmatpush1.msra.mxu0 %v895
    %945 = vmatprep.subr.mxu0 0.0
    %946 = vmatpush2.msra.mxu0 0.0
    %947 = vmatprep.subr.mxu0 0.0
    %948 = vmatpush2.msra.mxu0 0.0
    %949 = vmatprep.subr.mxu0 0.0
    %950 = vmatpush2.msra.mxu0 0.0
    %951 = vmatprep.subr.mxu0 0.0
    %952 = vmatpush2.msra.mxu0 0.0
    %953 = vmatprep.subr.mxu0 0.0
    %954 = vmatpush2.msra.mxu0 0.0
    %955 = vmatprep.subr.mxu0 0.0
    %956 = vmatpush2.msra.mxu0 0.0
    %957 = vmatprep.subr.mxu0 0.0
    %958 = vmatpush2.msra.mxu0 0.0
    %959 = vmatprep.subr.mxu0 0.0
    %960 = vmatpush2.msra.mxu0 0.0
    %961 = vmatprep.subr.mxu0 0.0
    %962 = vmatpush2.msra.mxu0 0.0
    %963 = vmatprep.subr.mxu0 0.0
    %964 = vmatpush2.msra.mxu0 0.0
    %965 = vmatprep.subr.mxu0 0.0
    %966 = vmatpush2.msra.mxu0 0.0
    %967 = vmatprep.subr.mxu0 0.0
    %968 = vmatpush2.msra.mxu0 0.0
    %969 = vmatprep.subr.mxu0 0.0
    %970 = vmatpush2.msra.mxu0 0.0
    %971 = vmatprep.subr.mxu0 0.0
    %972 = vmatpush2.msra.mxu0 0.0
    %973 = vmatprep.subr.mxu0 0.0
    %974 = vmatpush2.msra.mxu0 0.0
    %975 = vmatprep.subr.mxu0 0.0
    %976 = vmatpush2.msra.mxu0 0.0
    %977 = vmatprep.mubr.f32.mxu0 0.0
    %978 = vmatmul.mubr.f32.gmra.mxu0 %v911
    %v979 = vpop.f32.mrf.mxu0
    %v980 = vadd.f32 %v908, %v979
    %v981 = vpop.f32.mrf.mxu0
    %982 = vdwg.mxu0
    %983 = vst [vmem:[#allocation10] sm:$0xff] %v980
    // Predicated region
    $region42: #{tpu_custom_call.1} parent=1 // pred_check
      _
    $region43: #{tpu_custom_call.1} parent=1 // pred_check_branch
      %985 = sbr.rel (0) target = $region45
    $region44: #{tpu_custom_call.1} parent=1 // pred_region
      %s987 = ssub.s32 128, 128
      %988 = vsyncadd [#allocation4], %s987
      %s990 = sshll.u32 [#allocation10], 4
      %s991 = int_to_ptr.vmem [resolvable:$true] %s990
      %993 = dma.vmem_to_hbm [thread:$0]  %s991, 128, %s6, [#allocation4]
    $region45: #{tpu_custom_call.1} parent=1 // pred_fallthru
      _
    // Predicated region
    $region46: #{tpu_custom_call.1} parent=1 // pred_check
      _
    $region47: #{tpu_custom_call.1} parent=1 // pred_check_branch
      %995 = sbr.rel (0) target = $region49
    $region48: #{tpu_custom_call.1} parent=1 // pred_region
      %996 = dma.done [#allocation4], 128
    $region49: #{tpu_custom_call.1} parent=1 // pred_fallthru
      _
    %997 = vsyncpa [#allocation3], 1
    %998 = vsyncpa [#allocation6], 1
    %999 = vsyncpa [#allocation9], 1
    %1000 = vsyncpa [#allocation4], 1

// kernel: tpu_custom_call.1
$region0: #{tpu_custom_call.1}
  #allocation0 [shape = 'u32[]', space=smem, size = 0x4, offset = 0x4, fixed_abs, tag = 'smem constant byte address 0x4 - core index']
  #allocation1 [shape = 'u32[144,128]{1,0:T(1,128)}', space=vmem, size = 0x12000, scoped, tag = 'internal scratch']
  %s0 = inlined_call_operand.hbm [shape: f32[8,32,64], index: 0, kind: input, shape index: {}]
  %s1 = inlined_call_operand.hbm [shape: f32[32,64], index: 1, kind: input, shape index: {}]
  %s2 = inlined_call_operand.hbm [shape: f32[32,64], index: 2, kind: input, shape index: {}]
  %s3 = inlined_call_operand.vmem [shape: f32[1,64], index: 3, kind: input, shape index: {}]
  %s4 = inlined_call_operand.hbm [shape: f32[64,128], index: 4, kind: input, shape index: {}]
  %s5 = inlined_call_operand.vmem [shape: f32[1,128], index: 5, kind: input, shape index: {}]
  %s6 = inlined_call_operand.hbm [shape: f32[8,128], index: 6, kind: output, shape index: {}]
  %s7 = sld [smem:[#allocation0]]
  $region50: #{tpu_custom_call.1} parent=0
    _
  %s9 = ssub.s32 1, %s7
  %s10 = scalar_select 0, %s9, %s7
  $region1: #{tpu_custom_call.1} parent=0
    #allocation2 [shape = 'u8[131072]{0}', space=vmem, size = 0x20000, scoped, tag = 'input window, operand 0, single buffered']
    #allocation3 [shape = 's32[1]{0}', space=sflag, size = 0x4, scoped, tag = 'scoped memory for tpu_custom_call.1']
    #allocation4 [shape = 's32[1]{0}', space=sflag, size = 0x4, scoped, tag = 'scoped memory for tpu_custom_call.1']
    #allocation5 [shape = 'u8[16384]{0}', space=vmem, size = 0x4000, scoped, tag = 'input window, operand 1, single buffered']
    #allocation6 [shape = 's32[1]{0}', space=sflag, size = 0x4, scoped, tag = 'scoped memory for tpu_custom_call.1']
    #allocation7 [shape = 'u8[16384]{0}', space=vmem, size = 0x4000, scoped, tag = 'input window, operand 2, single buffered']
    #allocation8 [shape = 'u8[32768]{0}', space=vmem, size = 0x8000, scoped, tag = 'input window, operand 4, single buffered']
    #allocation9 [shape = 's32[1]{0}', space=sflag, size = 0x4, scoped, tag = 'scoped memory for tpu_custom_call.1']
    #allocation10 [shape = 'u8[4096]{0}', space=vmem, size = 0x1000, scoped, tag = 'output window, operand 0, single buffered']
    %11 = vsyncpa [#allocation3], 0
    %12 = vsyncpa [#allocation6], 0
    %13 = vsyncpa [#allocation9], 0
    %14 = vsyncpa [#allocation4], 0
    // Predicated region
    $region2: #{tpu_custom_call.1} parent=1 // pred_check
      _
    $region3: #{tpu_custom_call.1} parent=1 // pred_check_branch
      %16 = sbr.rel (0) target = $region5
    $region4: #{tpu_custom_call.1} parent=1 // pred_region
      %s18 = ssub.s32 4096, 4096
      %19 = vsyncadd [#allocation3], %s18
      %s20 = sshll.u32 [#allocation2], 4
      %s21 = int_to_ptr.vmem [resolvable:$true] %s20
      %26 = dma.hbm_to_vmem [thread:$0]  %s0, 4096, %s21, [#allocation3], 128, 128, 8
    $region5: #{tpu_custom_call.1} parent=1 // pred_fallthru
      _
    // Predicated region
    $region6: #{tpu_custom_call.1} parent=1 // pred_check
      _
    $region7: #{tpu_custom_call.1} parent=1 // pred_check_branch
      %28 = sbr.rel (0) target = $region9
    $region8: #{tpu_custom_call.1} parent=1 // pred_region
      %s30 = ssub.s32 512, 512
      %31 = vsyncadd [#allocation6], %s30
      %s32 = sshll.u32 [#allocation5], 4
      %s33 = int_to_ptr.vmem [resolvable:$true] %s32
      %38 = dma.hbm_to_vmem [thread:$0]  %s1, 512, %s33, [#allocation6], 128, 128, 8
    $region9: #{tpu_custom_call.1} parent=1 // pred_fallthru
      _
    // Predicated region
    $region10: #{tpu_custom_call.1} parent=1 // pred_check
      _
    $region11: #{tpu_custom_call.1} parent=1 // pred_check_branch
      %40 = sbr.rel (0) target = $region13
    $region12: #{tpu_custom_call.1} parent=1 // pred_region
      %s42 = ssub.s32 512, 512
      %43 = vsyncadd [#allocation6], %s42
      %s44 = sshll.u32 [#allocation7], 4
      %s45 = int_to_ptr.vmem [resolvable:$true] %s44
      %50 = dma.hbm_to_vmem [thread:$0]  %s2, 512, %s45, [#allocation6], 128, 128, 8
    $region13: #{tpu_custom_call.1} parent=1 // pred_fallthru
      _
    // Predicated region
    $region14: #{tpu_custom_call.1} parent=1 // pred_check
      _
    $region15: #{tpu_custom_call.1} parent=1 // pred_check_branch
      %52 = sbr.rel (0) target = $region17
    $region16: #{tpu_custom_call.1} parent=1 // pred_region
      _
    $region17: #{tpu_custom_call.1} parent=1 // pred_fallthru
      _
    // Predicated region
    $region18: #{tpu_custom_call.1} parent=1 // pred_check
      _
    $region19: #{tpu_custom_call.1} parent=1 // pred_check_branch
      %54 = sbr.rel (0) target = $region21
    $region20: #{tpu_custom_call.1} parent=1 // pred_region
      %s56 = ssub.s32 1024, 1024
      %57 = vsyncadd [#allocation9], %s56
      %s58 = sshll.u32 [#allocation8], 4
      %s59 = int_to_ptr.vmem [resolvable:$true] %s58
      %64 = dma.hbm_to_vmem [thread:$0]  %s4, 1024, %s59, [#allocation9], 128, 128, 8
    $region21: #{tpu_custom_call.1} parent=1 // pred_fallthru
      _
    // Predicated region
    $region22: #{tpu_custom_call.1} parent=1 // pred_check
      _
    $region23: #{tpu_custom_call.1} parent=1 // pred_check_branch
      %66 = sbr.rel (0) target = $region25
    $region24: #{tpu_custom_call.1} parent=1 // pred_region
      _
    $region25: #{tpu_custom_call.1} parent=1 // pred_fallthru
      _
    // Predicated region
    $region26: #{tpu_custom_call.1} parent=1 // pred_check
      _
    $region27: #{tpu_custom_call.1} parent=1 // pred_check_branch
      %68 = sbr.rel (0) target = $region29
    $region28: #{tpu_custom_call.1} parent=1 // pred_region
      %69 = dma.done [#allocation3], 4096
    $region29: #{tpu_custom_call.1} parent=1 // pred_fallthru
      _
    // Predicated region
    $region30: #{tpu_custom_call.1} parent=1 // pred_check
      _
    $region31: #{tpu_custom_call.1} parent=1 // pred_check_branch
      %71 = sbr.rel (0) target = $region33
    $region32: #{tpu_custom_call.1} parent=1 // pred_region
      %72 = dma.done [#allocation6], 512
    $region33: #{tpu_custom_call.1} parent=1 // pred_fallthru
      _
    // Predicated region
    $region34: #{tpu_custom_call.1} parent=1 // pred_check
      _
    $region35: #{tpu_custom_call.1} parent=1 // pred_check_branch
      %74 = sbr.rel (0) target = $region37
    $region36: #{tpu_custom_call.1} parent=1 // pred_region
      %75 = dma.done [#allocation6], 512
    $region37: #{tpu_custom_call.1} parent=1 // pred_fallthru
      _
    // Predicated region
    $region38: #{tpu_custom_call.1} parent=1 // pred_check
      _
    $region39: #{tpu_custom_call.1} parent=1 // pred_check_branch
      %77 = sbr.rel (0) target = $region41
    $region40: #{tpu_custom_call.1} parent=1 // pred_region
      %78 = dma.done [#allocation9], 1024
    $region41: #{tpu_custom_call.1} parent=1 // pred_fallthru
      _
    %v79 = vld [vmem:[#allocation2] sm:$0xff]
    %v80 = vld [vmem:[#allocation2 + $0x8] sm:$0xff]
    %v81 = vld [vmem:[#allocation2 + $0x10] sm:$0xff]
    %v82 = vld [vmem:[#allocation2 + $0x18] sm:$0xff]
    %v83 = vld [vmem:[#allocation2 + $0x20] sm:$0xff]
    %v84 = vld [vmem:[#allocation2 + $0x28] sm:$0xff]
    %v85 = vld [vmem:[#allocation2 + $0x30] sm:$0xff]
    %v86 = vld [vmem:[#allocation2 + $0x38] sm:$0xff]
    %v87 = vld [vmem:[#allocation2 + $0x40] sm:$0xff]
    %v88 = vld [vmem:[#allocation2 + $0x48] sm:$0xff]
    %v89 = vld [vmem:[#allocation2 + $0x50] sm:$0xff]
    %v90 = vld [vmem:[#allocation2 + $0x58] sm:$0xff]
    %v91 = vld [vmem:[#allocation2 + $0x60] sm:$0xff]
    %v92 = vld [vmem:[#allocation2 + $0x68] sm:$0xff]
    %v93 = vld [vmem:[#allocation2 + $0x70] sm:$0xff]
    %v94 = vld [vmem:[#allocation2 + $0x78] sm:$0xff]
    %v95 = vld [vmem:[#allocation2 + $0x80] sm:$0xff]
    %v96 = vld [vmem:[#allocation2 + $0x88] sm:$0xff]
    %v97 = vld [vmem:[#allocation2 + $0x90] sm:$0xff]
    %v98 = vld [vmem:[#allocation2 + $0x98] sm:$0xff]
    %v99 = vld [vmem:[#allocation2 + $0xa0] sm:$0xff]
    %v100 = vld [vmem:[#allocation2 + $0xa8] sm:$0xff]
    %v101 = vld [vmem:[#allocation2 + $0xb0] sm:$0xff]
    %v102 = vld [vmem:[#allocation2 + $0xb8] sm:$0xff]
    %v103 = vld [vmem:[#allocation2 + $0xc0] sm:$0xff]
    %v104 = vld [vmem:[#allocation2 + $0xc8] sm:$0xff]
    %v105 = vld [vmem:[#allocation2 + $0xd0] sm:$0xff]
    %v106 = vld [vmem:[#allocation2 + $0xd8] sm:$0xff]
    %v107 = vld [vmem:[#allocation2 + $0xe0] sm:$0xff]
    %v108 = vld [vmem:[#allocation2 + $0xe8] sm:$0xff]
    %v109 = vld [vmem:[#allocation2 + $0xf0] sm:$0xff]
    %v110 = vld [vmem:[#allocation2 + $0xf8] sm:$0xff]
    %vm111 = vcmask 523264
    %v112 = vsel %vm111, %v79, 0.0
    %113 = vadd.xlane.f32.xlu0 %v112
    %v114 = vpop.xlane.xlu0 %113
    %v115 = vsel %vm111, %v80, 0.0
    %116 = vadd.xlane.f32.xlu0 %v115
    %v117 = vpop.xlane.xlu0 %116
    %v118 = vsel %vm111, %v81, 0.0
    %119 = vadd.xlane.f32.xlu0 %v118
    %v120 = vpop.xlane.xlu0 %119
    %v121 = vsel %vm111, %v82, 0.0
    %122 = vadd.xlane.f32.xlu0 %v121
    %v123 = vpop.xlane.xlu0 %122
    %v124 = vsel %vm111, %v83, 0.0
    %125 = vadd.xlane.f32.xlu0 %v124
    %v126 = vpop.xlane.xlu0 %125
    %v127 = vsel %vm111, %v84, 0.0
    %128 = vadd.xlane.f32.xlu0 %v127
    %v129 = vpop.xlane.xlu0 %128
    %v130 = vsel %vm111, %v85, 0.0
    %131 = vadd.xlane.f32.xlu0 %v130
    %v132 = vpop.xlane.xlu0 %131
    %v133 = vsel %vm111, %v86, 0.0
    %134 = vadd.xlane.f32.xlu0 %v133
    %v135 = vpop.xlane.xlu0 %134
    %v136 = vsel %vm111, %v87, 0.0
    %137 = vadd.xlane.f32.xlu0 %v136
    %v138 = vpop.xlane.xlu0 %137
    %v139 = vsel %vm111, %v88, 0.0
    %140 = vadd.xlane.f32.xlu0 %v139
    %v141 = vpop.xlane.xlu0 %140
    %v142 = vsel %vm111, %v89, 0.0
    %143 = vadd.xlane.f32.xlu0 %v142
    %v144 = vpop.xlane.xlu0 %143
    %v145 = vsel %vm111, %v90, 0.0
    %146 = vadd.xlane.f32.xlu0 %v145
    %v147 = vpop.xlane.xlu0 %146
    %v148 = vsel %vm111, %v91, 0.0
    %149 = vadd.xlane.f32.xlu0 %v148
    %v150 = vpop.xlane.xlu0 %149
    %v151 = vsel %vm111, %v92, 0.0
    %152 = vadd.xlane.f32.xlu0 %v151
    %v153 = vpop.xlane.xlu0 %152
    %v154 = vsel %vm111, %v93, 0.0
    %155 = vadd.xlane.f32.xlu0 %v154
    %v156 = vpop.xlane.xlu0 %155
    %v157 = vsel %vm111, %v94, 0.0
    %158 = vadd.xlane.f32.xlu0 %v157
    %v159 = vpop.xlane.xlu0 %158
    %v160 = vsel %vm111, %v95, 0.0
    %161 = vadd.xlane.f32.xlu0 %v160
    %v162 = vpop.xlane.xlu0 %161
    %v163 = vsel %vm111, %v96, 0.0
    %164 = vadd.xlane.f32.xlu0 %v163
    %v165 = vpop.xlane.xlu0 %164
    %v166 = vsel %vm111, %v97, 0.0
    %167 = vadd.xlane.f32.xlu0 %v166
    %v168 = vpop.xlane.xlu0 %167
    %v169 = vsel %vm111, %v98, 0.0
    %170 = vadd.xlane.f32.xlu0 %v169
    %v171 = vpop.xlane.xlu0 %170
    %v172 = vsel %vm111, %v99, 0.0
    %173 = vadd.xlane.f32.xlu0 %v172
    %v174 = vpop.xlane.xlu0 %173
    %v175 = vsel %vm111, %v100, 0.0
    %176 = vadd.xlane.f32.xlu0 %v175
    %v177 = vpop.xlane.xlu0 %176
    %v178 = vsel %vm111, %v101, 0.0
    %179 = vadd.xlane.f32.xlu0 %v178
    %v180 = vpop.xlane.xlu0 %179
    %v181 = vsel %vm111, %v102, 0.0
    %182 = vadd.xlane.f32.xlu0 %v181
    %v183 = vpop.xlane.xlu0 %182
    %v184 = vsel %vm111, %v103, 0.0
    %185 = vadd.xlane.f32.xlu0 %v184
    %v186 = vpop.xlane.xlu0 %185
    %v187 = vsel %vm111, %v104, 0.0
    %188 = vadd.xlane.f32.xlu0 %v187
    %v189 = vpop.xlane.xlu0 %188
    %v190 = vsel %vm111, %v105, 0.0
    %191 = vadd.xlane.f32.xlu0 %v190
    %v192 = vpop.xlane.xlu0 %191
    %v193 = vsel %vm111, %v106, 0.0
    %194 = vadd.xlane.f32.xlu0 %v193
    %v195 = vpop.xlane.xlu0 %194
    %v196 = vsel %vm111, %v107, 0.0
    %197 = vadd.xlane.f32.xlu0 %v196
    %v198 = vpop.xlane.xlu0 %197
    %v199 = vsel %vm111, %v108, 0.0
    %200 = vadd.xlane.f32.xlu0 %v199
    %v201 = vpop.xlane.xlu0 %200
    %v202 = vsel %vm111, %v109, 0.0
    %203 = vadd.xlane.f32.xlu0 %v202
    %v204 = vpop.xlane.xlu0 %203
    %v205 = vsel %vm111, %v110, 0.0
    %206 = vadd.xlane.f32.xlu0 %v205
    %v207 = vpop.xlane.xlu0 %206
    %v208 = vmul.f32 %v114, 0.015625
    %v209 = vmul.f32 %v117, 0.015625
    %v210 = vmul.f32 %v120, 0.015625
    %v211 = vmul.f32 %v123, 0.015625
    %v212 = vmul.f32 %v126, 0.015625
    %v213 = vmul.f32 %v129, 0.015625
    %v214 = vmul.f32 %v132, 0.015625
    %v215 = vmul.f32 %v135, 0.015625
    %v216 = vmul.f32 %v138, 0.015625
    %v217 = vmul.f32 %v141, 0.015625
    %v218 = vmul.f32 %v144, 0.015625
    %v219 = vmul.f32 %v147, 0.015625
    %v220 = vmul.f32 %v150, 0.015625
    %v221 = vmul.f32 %v153, 0.015625
    %v222 = vmul.f32 %v156, 0.015625
    %v223 = vmul.f32 %v159, 0.015625
    %v224 = vmul.f32 %v162, 0.015625
    %v225 = vmul.f32 %v165, 0.015625
    %v226 = vmul.f32 %v168, 0.015625
    %v227 = vmul.f32 %v171, 0.015625
    %v228 = vmul.f32 %v174, 0.015625
    %v229 = vmul.f32 %v177, 0.015625
    %v230 = vmul.f32 %v180, 0.015625
    %v231 = vmul.f32 %v183, 0.015625
    %v232 = vmul.f32 %v186, 0.015625
    %v233 = vmul.f32 %v189, 0.015625
    %v234 = vmul.f32 %v192, 0.015625
    %v235 = vmul.f32 %v195, 0.015625
    %v236 = vmul.f32 %v198, 0.015625
    %v237 = vmul.f32 %v201, 0.015625
    %v238 = vmul.f32 %v204, 0.015625
    %v239 = vmul.f32 %v207, 0.015625
    %v240 = vsel %vm111, %v79, -inf
    %241 = vmax.xlane.f32.xlu0 %v240
    %v242 = vpop.xlane.xlu0 %241
    %v243 = vsel %vm111, %v80, -inf
    %244 = vmax.xlane.f32.xlu0 %v243
    %v245 = vpop.xlane.xlu0 %244
    %v246 = vsel %vm111, %v81, -inf
    %247 = vmax.xlane.f32.xlu0 %v246
    %v248 = vpop.xlane.xlu0 %247
    %v249 = vsel %vm111, %v82, -inf
    %250 = vmax.xlane.f32.xlu0 %v249
    %v251 = vpop.xlane.xlu0 %250
    %v252 = vsel %vm111, %v83, -inf
    %253 = vmax.xlane.f32.xlu0 %v252
    %v254 = vpop.xlane.xlu0 %253
    %v255 = vsel %vm111, %v84, -inf
    %256 = vmax.xlane.f32.xlu0 %v255
    %v257 = vpop.xlane.xlu0 %256
    %v258 = vsel %vm111, %v85, -inf
    %259 = vmax.xlane.f32.xlu0 %v258
    %v260 = vpop.xlane.xlu0 %259
    %v261 = vsel %vm111, %v86, -inf
    %262 = vmax.xlane.f32.xlu0 %v261
    %v263 = vpop.xlane.xlu0 %262
    %v264 = vsel %vm111, %v87, -inf
    %265 = vmax.xlane.f32.xlu0 %v264
    %v266 = vpop.xlane.xlu0 %265
    %v267 = vsel %vm111, %v88, -inf
    %268 = vmax.xlane.f32.xlu0 %v267
    %v269 = vpop.xlane.xlu0 %268
    %v270 = vsel %vm111, %v89, -inf
    %271 = vmax.xlane.f32.xlu0 %v270
    %v272 = vpop.xlane.xlu0 %271
    %v273 = vsel %vm111, %v90, -inf
    %274 = vmax.xlane.f32.xlu0 %v273
    %v275 = vpop.xlane.xlu0 %274
    %v276 = vsel %vm111, %v91, -inf
    %277 = vmax.xlane.f32.xlu0 %v276
    %v278 = vpop.xlane.xlu0 %277
    %v279 = vsel %vm111, %v92, -inf
    %280 = vmax.xlane.f32.xlu0 %v279
    %v281 = vpop.xlane.xlu0 %280
    %v282 = vsel %vm111, %v93, -inf
    %283 = vmax.xlane.f32.xlu0 %v282
    %v284 = vpop.xlane.xlu0 %283
    %v285 = vsel %vm111, %v94, -inf
    %286 = vmax.xlane.f32.xlu0 %v285
    %v287 = vpop.xlane.xlu0 %286
    %v288 = vsel %vm111, %v95, -inf
    %289 = vmax.xlane.f32.xlu0 %v288
    %v290 = vpop.xlane.xlu0 %289
    %v291 = vsel %vm111, %v96, -inf
    %292 = vmax.xlane.f32.xlu0 %v291
    %v293 = vpop.xlane.xlu0 %292
    %v294 = vsel %vm111, %v97, -inf
    %295 = vmax.xlane.f32.xlu0 %v294
    %v296 = vpop.xlane.xlu0 %295
    %v297 = vsel %vm111, %v98, -inf
    %298 = vmax.xlane.f32.xlu0 %v297
    %v299 = vpop.xlane.xlu0 %298
    %v300 = vsel %vm111, %v99, -inf
    %301 = vmax.xlane.f32.xlu0 %v300
    %v302 = vpop.xlane.xlu0 %301
    %v303 = vsel %vm111, %v100, -inf
    %304 = vmax.xlane.f32.xlu0 %v303
    %v305 = vpop.xlane.xlu0 %304
    %v306 = vsel %vm111, %v101, -inf
    %307 = vmax.xlane.f32.xlu0 %v306
    %v308 = vpop.xlane.xlu0 %307
    %v309 = vsel %vm111, %v102, -inf
    %310 = vmax.xlane.f32.xlu0 %v309
    %v311 = vpop.xlane.xlu0 %310
    %v312 = vsel %vm111, %v103, -inf
    %313 = vmax.xlane.f32.xlu0 %v312
    %v314 = vpop.xlane.xlu0 %313
    %v315 = vsel %vm111, %v104, -inf
    %316 = vmax.xlane.f32.xlu0 %v315
    %v317 = vpop.xlane.xlu0 %316
    %v318 = vsel %vm111, %v105, -inf
    %319 = vmax.xlane.f32.xlu0 %v318
    %v320 = vpop.xlane.xlu0 %319
    %v321 = vsel %vm111, %v106, -inf
    %322 = vmax.xlane.f32.xlu0 %v321
    %v323 = vpop.xlane.xlu0 %322
    %v324 = vsel %vm111, %v107, -inf
    %325 = vmax.xlane.f32.xlu0 %v324
    %v326 = vpop.xlane.xlu0 %325
    %v327 = vsel %vm111, %v108, -inf
    %328 = vmax.xlane.f32.xlu0 %v327
    %v329 = vpop.xlane.xlu0 %328
    %v330 = vsel %vm111, %v109, -inf
    %331 = vmax.xlane.f32.xlu0 %v330
    %v332 = vpop.xlane.xlu0 %331
    %v333 = vsel %vm111, %v110, -inf
    %334 = vmax.xlane.f32.xlu0 %v333
    %v335 = vpop.xlane.xlu0 %334
    %v336 = vld [vmem:[#allocation5] sm:$0xff]
    %v337 = vld [vmem:[#allocation5 + $0x8] sm:$0xff]
    %v338 = vld [vmem:[#allocation5 + $0x10] sm:$0xff]
    %v339 = vld [vmem:[#allocation5 + $0x18] sm:$0xff]
    %v340 = vld [vmem:[#allocation7] sm:$0xff]
    %v341 = vld [vmem:[#allocation7 + $0x8] sm:$0xff]
    %v342 = vld [vmem:[#allocation7 + $0x10] sm:$0xff]
    %v343 = vld [vmem:[#allocation7 + $0x18] sm:$0xff]
    %v376 = vlaneseq
    %v377 = vand.u32 %v376, 127
    %v378 = vlaneseq
    %v379 = vshrl.u32 %v378, 7
    %v380 = vsub.s32 %v377, %v379
    %v381 = vrot.slane %v242, %v380
    %v382 = vadd.s32 %v377, 4294967288
    %v383 = vlaneseq
    %v384 = vshrl.u32 %v383, 7
    %v385 = vsub.s32 %v382, %v384
    %v386 = vrot.slane %v245, %v385
    %vm387 = vcmask 130112
    %v388 = vsel %vm387, %v386, %v381
    %v389 = vadd.s32 %v377, 4294967280
    %v390 = vlaneseq
    %v391 = vshrl.u32 %v390, 7
    %v392 = vsub.s32 %v389, %v391
    %v393 = vrot.slane %v248, %v392
    %vm394 = vcmask 195712
    %v395 = vsel %vm394, %v393, %v388
    %v396 = vadd.s32 %v377, 4294967272
    %v397 = vlaneseq
    %v398 = vshrl.u32 %v397, 7
    %v399 = vsub.s32 %v396, %v398
    %v400 = vrot.slane %v251, %v399
    %vm401 = vcmask 261312
    %v402 = vsel %vm401, %v400, %v395
    %v403 = vlaneseq
    %v404 = vshrl.u32 %v403, 7
    %v405 = vsub.s32 %v377, %v404
    %v406 = vrot.slane %v254, %v405
    %v407 = vlaneseq
    %v408 = vshrl.u32 %v407, 7
    %v409 = vsub.s32 %v382, %v408
    %v410 = vrot.slane %v257, %v409
    %v411 = vsel %vm387, %v410, %v406
    %v412 = vlaneseq
    %v413 = vshrl.u32 %v412, 7
    %v414 = vsub.s32 %v389, %v413
    %v415 = vrot.slane %v260, %v414
    %v416 = vsel %vm394, %v415, %v411
    %v417 = vlaneseq
    %v418 = vshrl.u32 %v417, 7
    %v419 = vsub.s32 %v396, %v418
    %v420 = vrot.slane %v263, %v419
    %v421 = vsel %vm401, %v420, %v416
    %v422 = vlaneseq
    %v423 = vshrl.u32 %v422, 7
    %v424 = vsub.s32 %v377, %v423
    %v425 = vrot.slane %v266, %v424
    %v426 = vlaneseq
    %v427 = vshrl.u32 %v426, 7
    %v428 = vsub.s32 %v382, %v427
    %v429 = vrot.slane %v269, %v428
    %v430 = vsel %vm387, %v429, %v425
    %v431 = vlaneseq
    %v432 = vshrl.u32 %v431, 7
    %v433 = vsub.s32 %v389, %v432
    %v434 = vrot.slane %v272, %v433
    %v435 = vsel %vm394, %v434, %v430
    %v436 = vlaneseq
    %v437 = vshrl.u32 %v436, 7
    %v438 = vsub.s32 %v396, %v437
    %v439 = vrot.slane %v275, %v438
    %v440 = vsel %vm401, %v439, %v435
    %v441 = vlaneseq
    %v442 = vshrl.u32 %v441, 7
    %v443 = vsub.s32 %v377, %v442
    %v444 = vrot.slane %v278, %v443
    %v445 = vlaneseq
    %v446 = vshrl.u32 %v445, 7
    %v447 = vsub.s32 %v382, %v446
    %v448 = vrot.slane %v281, %v447
    %v449 = vsel %vm387, %v448, %v444
    %v450 = vlaneseq
    %v451 = vshrl.u32 %v450, 7
    %v452 = vsub.s32 %v389, %v451
    %v453 = vrot.slane %v284, %v452
    %v454 = vsel %vm394, %v453, %v449
    %v455 = vlaneseq
    %v456 = vshrl.u32 %v455, 7
    %v457 = vsub.s32 %v396, %v456
    %v458 = vrot.slane %v287, %v457
    %v459 = vsel %vm401, %v458, %v454
    %v460 = vlaneseq
    %v461 = vshrl.u32 %v460, 7
    %v462 = vsub.s32 %v377, %v461
    %v463 = vrot.slane %v290, %v462
    %v464 = vlaneseq
    %v465 = vshrl.u32 %v464, 7
    %v466 = vsub.s32 %v382, %v465
    %v467 = vrot.slane %v293, %v466
    %v468 = vsel %vm387, %v467, %v463
    %v469 = vlaneseq
    %v470 = vshrl.u32 %v469, 7
    %v471 = vsub.s32 %v389, %v470
    %v472 = vrot.slane %v296, %v471
    %v473 = vsel %vm394, %v472, %v468
    %v474 = vlaneseq
    %v475 = vshrl.u32 %v474, 7
    %v476 = vsub.s32 %v396, %v475
    %v477 = vrot.slane %v299, %v476
    %v478 = vsel %vm401, %v477, %v473
    %v479 = vlaneseq
    %v480 = vshrl.u32 %v479, 7
    %v481 = vsub.s32 %v377, %v480
    %v482 = vrot.slane %v302, %v481
    %v483 = vlaneseq
    %v484 = vshrl.u32 %v483, 7
    %v485 = vsub.s32 %v382, %v484
    %v486 = vrot.slane %v305, %v485
    %v487 = vsel %vm387, %v486, %v482
    %v488 = vlaneseq
    %v489 = vshrl.u32 %v488, 7
    %v490 = vsub.s32 %v389, %v489
    %v491 = vrot.slane %v308, %v490
    %v492 = vsel %vm394, %v491, %v487
    %v493 = vlaneseq
    %v494 = vshrl.u32 %v493, 7
    %v495 = vsub.s32 %v396, %v494
    %v496 = vrot.slane %v311, %v495
    %v497 = vsel %vm401, %v496, %v492
    %v498 = vlaneseq
    %v499 = vshrl.u32 %v498, 7
    %v500 = vsub.s32 %v377, %v499
    %v501 = vrot.slane %v314, %v500
    %v502 = vlaneseq
    %v503 = vshrl.u32 %v502, 7
    %v504 = vsub.s32 %v382, %v503
    %v505 = vrot.slane %v317, %v504
    %v506 = vsel %vm387, %v505, %v501
    %v507 = vlaneseq
    %v508 = vshrl.u32 %v507, 7
    %v509 = vsub.s32 %v389, %v508
    %v510 = vrot.slane %v320, %v509
    %v511 = vsel %vm394, %v510, %v506
    %v512 = vlaneseq
    %v513 = vshrl.u32 %v512, 7
    %v514 = vsub.s32 %v396, %v513
    %v515 = vrot.slane %v323, %v514
    %v516 = vsel %vm401, %v515, %v511
    %v517 = vlaneseq
    %v518 = vshrl.u32 %v517, 7
    %v519 = vsub.s32 %v377, %v518
    %v520 = vrot.slane %v326, %v519
    %v521 = vlaneseq
    %v522 = vshrl.u32 %v521, 7
    %v523 = vsub.s32 %v382, %v522
    %v524 = vrot.slane %v329, %v523
    %v525 = vsel %vm387, %v524, %v520
    %v526 = vlaneseq
    %v527 = vshrl.u32 %v526, 7
    %v528 = vsub.s32 %v389, %v527
    %v529 = vrot.slane %v332, %v528
    %v530 = vsel %vm394, %v529, %v525
    %v531 = vlaneseq
    %v532 = vshrl.u32 %v531, 7
    %v533 = vsub.s32 %v396, %v532
    %v534 = vrot.slane %v335, %v533
    %v535 = vsel %vm401, %v534, %v530
    %vm536 = vcmask 1041409
    %v537 = vsel %vm536, %v421, %v402
    %vm538 = vcmask 1042434
    %v539 = vsel %vm538, %v440, %v537
    %vm540 = vcmask 1043459
    %v541 = vsel %vm540, %v459, %v539
    %vm542 = vcmask 1044484
    %v543 = vsel %vm542, %v478, %v541
    %vm544 = vcmask 1045509
    %v545 = vsel %vm544, %v497, %v543
    %vm546 = vcmask 1046534
    %v547 = vsel %vm546, %v516, %v545
    %vm548 = vcmask 1047559
    %v549 = vsel %vm548, %v535, %v547
    %vm550 = vcmask 261120
    %v551 = vsel %vm550, %v549, 0
    %553 = vmatprep.subr.mxu0 0.0
    %554 = vmatpush1.msra.mxu0 0.0
    %555 = vmatprep.subr.mxu0 0.0
    %556 = vmatpush1.msra.mxu0 0.0
    %557 = vmatprep.subr.mxu0 0.0
    %558 = vmatpush1.msra.mxu0 0.0
    %559 = vmatprep.subr.mxu0 0.0
    %560 = vmatpush1.msra.mxu0 0.0
    %561 = vmatprep.subr.mxu0 0.0
    %562 = vmatpush1.msra.mxu0 0.0
    %563 = vmatprep.subr.mxu0 0.0
    %564 = vmatpush1.msra.mxu0 0.0
    %565 = vmatprep.subr.mxu0 0.0
    %566 = vmatpush1.msra.mxu0 0.0
    %567 = vmatprep.subr.mxu0 0.0
    %568 = vmatpush1.msra.mxu0 0.0
    %569 = vmatprep.subr.mxu0 0.0
    %570 = vmatpush1.msra.mxu0 0.0
    %571 = vmatprep.subr.mxu0 0.0
    %572 = vmatpush1.msra.mxu0 0.0
    %573 = vmatprep.subr.mxu0 0.0
    %574 = vmatpush1.msra.mxu0 0.0
    %575 = vmatprep.subr.mxu0 0.0
    %576 = vmatpush1.msra.mxu0 0.0
    %577 = vmatprep.subr.mxu0 0.0
    %578 = vmatpush1.msra.mxu0 %v343
    %579 = vmatprep.subr.mxu0 0.0
    %580 = vmatpush1.msra.mxu0 %v342
    %581 = vmatprep.subr.mxu0 0.0
    %582 = vmatpush1.msra.mxu0 %v341
    %583 = vmatprep.subr.mxu0 0.0
    %584 = vmatpush1.msra.mxu0 %v340
    %585 = vmatprep.subr.mxu0 0.0
    %586 = vmatpush2.msra.mxu0 0.0
    %587 = vmatprep.subr.mxu0 0.0
    %588 = vmatpush2.msra.mxu0 0.0
    %589 = vmatprep.subr.mxu0 0.0
    %590 = vmatpush2.msra.mxu0 0.0
    %591 = vmatprep.subr.mxu0 0.0
    %592 = vmatpush2.msra.mxu0 0.0
    %593 = vmatprep.subr.mxu0 0.0
    %594 = vmatpush2.msra.mxu0 0.0
    %595 = vmatprep.subr.mxu0 0.0
    %596 = vmatpush2.msra.mxu0 0.0
    %597 = vmatprep.subr.mxu0 0.0
    %598 = vmatpush2.msra.mxu0 0.0
    %599 = vmatprep.subr.mxu0 0.0
    %600 = vmatpush2.msra.mxu0 0.0
    %601 = vmatprep.subr.mxu0 0.0
    %602 = vmatpush2.msra.mxu0 0.0
    %603 = vmatprep.subr.mxu0 0.0
    %604 = vmatpush2.msra.mxu0 0.0
    %605 = vmatprep.subr.mxu0 0.0
    %606 = vmatpush2.msra.mxu0 0.0
    %607 = vmatprep.subr.mxu0 0.0
    %608 = vmatpush2.msra.mxu0 0.0
    %609 = vmatprep.subr.mxu0 0.0
    %610 = vmatpush2.msra.mxu0 0.0
    %611 = vmatprep.subr.mxu0 0.0
    %612 = vmatpush2.msra.mxu0 0.0
    %613 = vmatprep.subr.mxu0 0.0
    %614 = vmatpush2.msra.mxu0 0.0
    %615 = vmatprep.subr.mxu0 0.0
    %616 = vmatpush2.msra.mxu0 0.0
    %617 = vmatprep.mubr.f32.mxu0 0.0
    %618 = vmatmul.mubr.f32.gmra.mxu0 %v551
    %v619 = vpop.f32.mrf.mxu0
    %v620 = vadd.f32 0.0, %v619
    %v621 = vpop.f32.mrf.mxu0
    %622 = vdwg.mxu0
    %v655 = vlaneseq
    %v656 = vshrl.u32 %v655, 7
    %v657 = vsub.s32 %v377, %v656
    %v658 = vrot.slane %v208, %v657
    %v659 = vlaneseq
    %v660 = vshrl.u32 %v659, 7
    %v661 = vsub.s32 %v382, %v660
    %v662 = vrot.slane %v209, %v661
    %v663 = vsel %vm387, %v662, %v658
    %v664 = vlaneseq
    %v665 = vshrl.u32 %v664, 7
    %v666 = vsub.s32 %v389, %v665
    %v667 = vrot.slane %v210, %v666
    %v668 = vsel %vm394, %v667, %v663
    %v669 = vlaneseq
    %v670 = vshrl.u32 %v669, 7
    %v671 = vsub.s32 %v396, %v670
    %v672 = vrot.slane %v211, %v671
    %v673 = vsel %vm401, %v672, %v668
    %v674 = vlaneseq
    %v675 = vshrl.u32 %v674, 7
    %v676 = vsub.s32 %v377, %v675
    %v677 = vrot.slane %v212, %v676
    %v678 = vlaneseq
    %v679 = vshrl.u32 %v678, 7
    %v680 = vsub.s32 %v382, %v679
    %v681 = vrot.slane %v213, %v680
    %v682 = vsel %vm387, %v681, %v677
    %v683 = vlaneseq
    %v684 = vshrl.u32 %v683, 7
    %v685 = vsub.s32 %v389, %v684
    %v686 = vrot.slane %v214, %v685
    %v687 = vsel %vm394, %v686, %v682
    %v688 = vlaneseq
    %v689 = vshrl.u32 %v688, 7
    %v690 = vsub.s32 %v396, %v689
    %v691 = vrot.slane %v215, %v690
    %v692 = vsel %vm401, %v691, %v687
    %v693 = vlaneseq
    %v694 = vshrl.u32 %v693, 7
    %v695 = vsub.s32 %v377, %v694
    %v696 = vrot.slane %v216, %v695
    %v697 = vlaneseq
    %v698 = vshrl.u32 %v697, 7
    %v699 = vsub.s32 %v382, %v698
    %v700 = vrot.slane %v217, %v699
    %v701 = vsel %vm387, %v700, %v696
    %v702 = vlaneseq
    %v703 = vshrl.u32 %v702, 7
    %v704 = vsub.s32 %v389, %v703
    %v705 = vrot.slane %v218, %v704
    %v706 = vsel %vm394, %v705, %v701
    %v707 = vlaneseq
    %v708 = vshrl.u32 %v707, 7
    %v709 = vsub.s32 %v396, %v708
    %v710 = vrot.slane %v219, %v709
    %v711 = vsel %vm401, %v710, %v706
    %v712 = vlaneseq
    %v713 = vshrl.u32 %v712, 7
    %v714 = vsub.s32 %v377, %v713
    %v715 = vrot.slane %v220, %v714
    %v716 = vlaneseq
    %v717 = vshrl.u32 %v716, 7
    %v718 = vsub.s32 %v382, %v717
    %v719 = vrot.slane %v221, %v718
    %v720 = vsel %vm387, %v719, %v715
    %v721 = vlaneseq
    %v722 = vshrl.u32 %v721, 7
    %v723 = vsub.s32 %v389, %v722
    %v724 = vrot.slane %v222, %v723
    %v725 = vsel %vm394, %v724, %v720
    %v726 = vlaneseq
    %v727 = vshrl.u32 %v726, 7
    %v728 = vsub.s32 %v396, %v727
    %v729 = vrot.slane %v223, %v728
    %v730 = vsel %vm401, %v729, %v725
    %v731 = vlaneseq
    %v732 = vshrl.u32 %v731, 7
    %v733 = vsub.s32 %v377, %v732
    %v734 = vrot.slane %v224, %v733
    %v735 = vlaneseq
    %v736 = vshrl.u32 %v735, 7
    %v737 = vsub.s32 %v382, %v736
    %v738 = vrot.slane %v225, %v737
    %v739 = vsel %vm387, %v738, %v734
    %v740 = vlaneseq
    %v741 = vshrl.u32 %v740, 7
    %v742 = vsub.s32 %v389, %v741
    %v743 = vrot.slane %v226, %v742
    %v744 = vsel %vm394, %v743, %v739
    %v745 = vlaneseq
    %v746 = vshrl.u32 %v745, 7
    %v747 = vsub.s32 %v396, %v746
    %v748 = vrot.slane %v227, %v747
    %v749 = vsel %vm401, %v748, %v744
    %v750 = vlaneseq
    %v751 = vshrl.u32 %v750, 7
    %v752 = vsub.s32 %v377, %v751
    %v753 = vrot.slane %v228, %v752
    %v754 = vlaneseq
    %v755 = vshrl.u32 %v754, 7
    %v756 = vsub.s32 %v382, %v755
    %v757 = vrot.slane %v229, %v756
    %v758 = vsel %vm387, %v757, %v753
    %v759 = vlaneseq
    %v760 = vshrl.u32 %v759, 7
    %v761 = vsub.s32 %v389, %v760
    %v762 = vrot.slane %v230, %v761
    %v763 = vsel %vm394, %v762, %v758
    %v764 = vlaneseq
    %v765 = vshrl.u32 %v764, 7
    %v766 = vsub.s32 %v396, %v765
    %v767 = vrot.slane %v231, %v766
    %v768 = vsel %vm401, %v767, %v763
    %v769 = vlaneseq
    %v770 = vshrl.u32 %v769, 7
    %v771 = vsub.s32 %v377, %v770
    %v772 = vrot.slane %v232, %v771
    %v773 = vlaneseq
    %v774 = vshrl.u32 %v773, 7
    %v775 = vsub.s32 %v382, %v774
    %v776 = vrot.slane %v233, %v775
    %v777 = vsel %vm387, %v776, %v772
    %v778 = vlaneseq
    %v779 = vshrl.u32 %v778, 7
    %v780 = vsub.s32 %v389, %v779
    %v781 = vrot.slane %v234, %v780
    %v782 = vsel %vm394, %v781, %v777
    %v783 = vlaneseq
    %v784 = vshrl.u32 %v783, 7
    %v785 = vsub.s32 %v396, %v784
    %v786 = vrot.slane %v235, %v785
    %v787 = vsel %vm401, %v786, %v782
    %v788 = vlaneseq
    %v789 = vshrl.u32 %v788, 7
    %v790 = vsub.s32 %v377, %v789
    %v791 = vrot.slane %v236, %v790
    %v792 = vlaneseq
    %v793 = vshrl.u32 %v792, 7
    %v794 = vsub.s32 %v382, %v793
    %v795 = vrot.slane %v237, %v794
    %v796 = vsel %vm387, %v795, %v791
    %v797 = vlaneseq
    %v798 = vshrl.u32 %v797, 7
    %v799 = vsub.s32 %v389, %v798
    %v800 = vrot.slane %v238, %v799
    %v801 = vsel %vm394, %v800, %v796
    %v802 = vlaneseq
    %v803 = vshrl.u32 %v802, 7
    %v804 = vsub.s32 %v396, %v803
    %v805 = vrot.slane %v239, %v804
    %v806 = vsel %vm401, %v805, %v801
    %v807 = vsel %vm536, %v692, %v673
    %v808 = vsel %vm538, %v711, %v807
    %v809 = vsel %vm540, %v730, %v808
    %v810 = vsel %vm542, %v749, %v809
    %v811 = vsel %vm544, %v768, %v810
    %v812 = vsel %vm546, %v787, %v811
    %v813 = vsel %vm548, %v806, %v812
    %v814 = vsel %vm550, %v813, 0
    %816 = vmatprep.subr.mxu0 0.0
    %817 = vmatpush1.msra.mxu0 0.0
    %818 = vmatprep.subr.mxu0 0.0
    %819 = vmatpush1.msra.mxu0 0.0
    %820 = vmatprep.subr.mxu0 0.0
    %821 = vmatpush1.msra.mxu0 0.0
    %822 = vmatprep.subr.mxu0 0.0
    %823 = vmatpush1.msra.mxu0 0.0
    %824 = vmatprep.subr.mxu0 0.0
    %825 = vmatpush1.msra.mxu0 0.0
    %826 = vmatprep.subr.mxu0 0.0
    %827 = vmatpush1.msra.mxu0 0.0
    %828 = vmatprep.subr.mxu0 0.0
    %829 = vmatpush1.msra.mxu0 0.0
    %830 = vmatprep.subr.mxu0 0.0
    %831 = vmatpush1.msra.mxu0 0.0
    %832 = vmatprep.subr.mxu0 0.0
    %833 = vmatpush1.msra.mxu0 0.0
    %834 = vmatprep.subr.mxu0 0.0
    %835 = vmatpush1.msra.mxu0 0.0
    %836 = vmatprep.subr.mxu0 0.0
    %837 = vmatpush1.msra.mxu0 0.0
    %838 = vmatprep.subr.mxu0 0.0
    %839 = vmatpush1.msra.mxu0 0.0
    %840 = vmatprep.subr.mxu0 0.0
    %841 = vmatpush1.msra.mxu0 %v339
    %842 = vmatprep.subr.mxu0 0.0
    %843 = vmatpush1.msra.mxu0 %v338
    %844 = vmatprep.subr.mxu0 0.0
    %845 = vmatpush1.msra.mxu0 %v337
    %846 = vmatprep.subr.mxu0 0.0
    %847 = vmatpush1.msra.mxu0 %v336
    %848 = vmatprep.subr.mxu0 0.0
    %849 = vmatpush2.msra.mxu0 0.0
    %850 = vmatprep.subr.mxu0 0.0
    %851 = vmatpush2.msra.mxu0 0.0
    %852 = vmatprep.subr.mxu0 0.0
    %853 = vmatpush2.msra.mxu0 0.0
    %854 = vmatprep.subr.mxu0 0.0
    %855 = vmatpush2.msra.mxu0 0.0
    %856 = vmatprep.subr.mxu0 0.0
    %857 = vmatpush2.msra.mxu0 0.0
    %858 = vmatprep.subr.mxu0 0.0
    %859 = vmatpush2.msra.mxu0 0.0
    %860 = vmatprep.subr.mxu0 0.0
    %861 = vmatpush2.msra.mxu0 0.0
    %862 = vmatprep.subr.mxu0 0.0
    %863 = vmatpush2.msra.mxu0 0.0
    %864 = vmatprep.subr.mxu0 0.0
    %865 = vmatpush2.msra.mxu0 0.0
    %866 = vmatprep.subr.mxu0 0.0
    %867 = vmatpush2.msra.mxu0 0.0
    %868 = vmatprep.subr.mxu0 0.0
    %869 = vmatpush2.msra.mxu0 0.0
    %870 = vmatprep.subr.mxu0 0.0
    %871 = vmatpush2.msra.mxu0 0.0
    %872 = vmatprep.subr.mxu0 0.0
    %873 = vmatpush2.msra.mxu0 0.0
    %874 = vmatprep.subr.mxu0 0.0
    %875 = vmatpush2.msra.mxu0 0.0
    %876 = vmatprep.subr.mxu0 0.0
    %877 = vmatpush2.msra.mxu0 0.0
    %878 = vmatprep.subr.mxu0 0.0
    %879 = vmatpush2.msra.mxu0 0.0
    %880 = vmatprep.mubr.f32.mxu0 0.0
    %881 = vmatmul.mubr.f32.gmra.mxu0 %v814
    %v882 = vpop.f32.mrf.mxu0
    %v883 = vadd.f32 %v620, %v882
    %v884 = vpop.f32.mrf.mxu0
    %885 = vdwg.mxu0
    %v886 = vld [vmem:[%s3] sm:$0x1]
    %v888 = vlaneseq
    %v889 = vshrl.u32 %v888, 7
    %v890 = vsub.s32 0, %v889
    %v891 = vrot.slane %v886, %v890
    %v893 = vadd.f32 %v883, %v891
    %v894 = vmax.f32 %v893, 0.0
    %v895 = vld [vmem:[#allocation8] sm:$0xff]
    %v896 = vld [vmem:[#allocation8 + $0x8] sm:$0xff]
    %v897 = vld [vmem:[#allocation8 + $0x10] sm:$0xff]
    %v898 = vld [vmem:[#allocation8 + $0x18] sm:$0xff]
    %v899 = vld [vmem:[#allocation8 + $0x20] sm:$0xff]
    %v900 = vld [vmem:[#allocation8 + $0x28] sm:$0xff]
    %v901 = vld [vmem:[#allocation8 + $0x30] sm:$0xff]
    %v902 = vld [vmem:[#allocation8 + $0x38] sm:$0xff]
    %v903 = vld [vmem:[%s5] sm:$0x1]
    %v905 = vlaneseq
    %v906 = vshrl.u32 %v905, 7
    %v907 = vsub.s32 0, %v906
    %v908 = vrot.slane %v903, %v907
    %v911 = vsel %vm111, %v894, 0
    %913 = vmatprep.subr.mxu0 0.0
    %914 = vmatpush1.msra.mxu0 0.0
    %915 = vmatprep.subr.mxu0 0.0
    %916 = vmatpush1.msra.mxu0 0.0
    %917 = vmatprep.subr.mxu0 0.0
    %918 = vmatpush1.msra.mxu0 0.0
    %919 = vmatprep.subr.mxu0 0.0
    %920 = vmatpush1.msra.mxu0 0.0
    %921 = vmatprep.subr.mxu0 0.0
    %922 = vmatpush1.msra.mxu0 0.0
    %923 = vmatprep.subr.mxu0 0.0
    %924 = vmatpush1.msra.mxu0 0.0
    %925 = vmatprep.subr.mxu0 0.0
    %926 = vmatpush1.msra.mxu0 0.0
    %927 = vmatprep.subr.mxu0 0.0
    %928 = vmatpush1.msra.mxu0 0.0
    %929 = vmatprep.subr.mxu0 0.0
    %930 = vmatpush1.msra.mxu0 %v902
    %931 = vmatprep.subr.mxu0 0.0
    %932 = vmatpush1.msra.mxu0 %v901
    %933 = vmatprep.subr.mxu0 0.0
    %934 = vmatpush1.msra.mxu0 %v900
    %935 = vmatprep.subr.mxu0 0.0
    %936 = vmatpush1.msra.mxu0 %v899
    %937 = vmatprep.subr.mxu0 0.0
    %938 = vmatpush1.msra.mxu0 %v898
    %939 = vmatprep.subr.mxu0 0.0
    %940 = vmatpush1.msra.mxu0 %v897
    %941 = vmatprep.subr.mxu0 0.0
    %942 = vmatpush1.msra.mxu0 %v896
    %943 = vmatprep.subr.mxu0 0.0
    %944 = vmatpush1.msra.mxu0 %v895
    %945 = vmatprep.subr.mxu0 0.0
    %946 = vmatpush2.msra.mxu0 0.0
    %947 = vmatprep.subr.mxu0 0.0
    %948 = vmatpush2.msra.mxu0 0.0
    %949 = vmatprep.subr.mxu0 0.0
    %950 = vmatpush2.msra.mxu0 0.0
    %951 = vmatprep.subr.mxu0 0.0
    %952 = vmatpush2.msra.mxu0 0.0
    %953 = vmatprep.subr.mxu0 0.0
    %954 = vmatpush2.msra.mxu0 0.0
    %955 = vmatprep.subr.mxu0 0.0
    %956 = vmatpush2.msra.mxu0 0.0
    %957 = vmatprep.subr.mxu0 0.0
    %958 = vmatpush2.msra.mxu0 0.0
    %959 = vmatprep.subr.mxu0 0.0
    %960 = vmatpush2.msra.mxu0 0.0
    %961 = vmatprep.subr.mxu0 0.0
    %962 = vmatpush2.msra.mxu0 0.0
    %963 = vmatprep.subr.mxu0 0.0
    %964 = vmatpush2.msra.mxu0 0.0
    %965 = vmatprep.subr.mxu0 0.0
    %966 = vmatpush2.msra.mxu0 0.0
    %967 = vmatprep.subr.mxu0 0.0
    %968 = vmatpush2.msra.mxu0 0.0
    %969 = vmatprep.subr.mxu0 0.0
    %970 = vmatpush2.msra.mxu0 0.0
    %971 = vmatprep.subr.mxu0 0.0
    %972 = vmatpush2.msra.mxu0 0.0
    %973 = vmatprep.subr.mxu0 0.0
    %974 = vmatpush2.msra.mxu0 0.0
    %975 = vmatprep.subr.mxu0 0.0
    %976 = vmatpush2.msra.mxu0 0.0
    %977 = vmatprep.mubr.f32.mxu0 0.0
    %978 = vmatmul.mubr.f32.gmra.mxu0 %v911
    %v979 = vpop.f32.mrf.mxu0
    %v980 = vadd.f32 %v908, %v979
    %v981 = vpop.f32.mrf.mxu0
    %982 = vdwg.mxu0
    %983 = vst [vmem:[#allocation10] sm:$0xff] %v980
    // Predicated region
    $region42: #{tpu_custom_call.1} parent=1 // pred_check
      _
    $region43: #{tpu_custom_call.1} parent=1 // pred_check_branch
      %985 = sbr.rel (0) target = $region45
    $region44: #{tpu_custom_call.1} parent=1 // pred_region
      %s987 = ssub.s32 128, 128
      %988 = vsyncadd [#allocation4], %s987
      %s990 = sshll.u32 [#allocation10], 4
      %s991 = int_to_ptr.vmem [resolvable:$true] %s990
      %993 = dma.vmem_to_hbm [thread:$0]  %s991, 128, %s6, [#allocation4]
    $region45: #{tpu_custom_call.1} parent=1 // pred_fallthru
      _
    // Predicated region
    $region46: #{tpu_custom_call.1} parent=1 // pred_check
      _
    $region47: #{tpu_custom_call.1} parent=1 // pred_check_branch
      %995 = sbr.rel (0) target = $region49
    $region48: #{tpu_custom_call.1} parent=1 // pred_region
      %996 = dma.done [#allocation4], 128
    $region49: #{tpu_custom_call.1} parent=1 // pred_fallthru
      _
    %997 = vsyncpa [#allocation3], 1
    %998 = vsyncpa [#allocation6], 1
    %999 = vsyncpa [#allocation9], 1
    %1000 = vsyncpa [#allocation4], 1

</llo_original>
